<compile_context>
chip_gen: v6e
topology: v6e:2x2x1
jax: 0.10.0
libtpu: 0.0.40
codegen_flags: <defaults>
</compile_context>

<pallas_src>
import jax
import jax.numpy as jnp
from jax.experimental import pallas as pl
from jax.experimental.pallas import tpu as pltpu


# ----------------------------------------------------------------------------
# Pallas kernel 1: lane-dense conv GEMM     out = relu(W @ patches + b)
#   W       : (C_out, C_in*9)  bf16  (same block every grid step -> resident)
#   b       : (C_out, 1)       f32
#   patches : (C_in*9, tile)   bf16  (tiled along the pixel axis)
#   out     : (C_out, tile)    bf16  (lane-dense: last dim = pixels)
# ----------------------------------------------------------------------------
def _conv_gemm_kernel(w_ref, b_ref, p_ref, o_ref):
    acc = jnp.dot(w_ref[...], p_ref[...], preferred_element_type=jnp.float32)
    acc = jnp.maximum(acc + b_ref[...], 0.0)
    o_ref[...] = acc.astype(o_ref.dtype)


_COL_TILE = 4096   # pixel-axis tile: K<=108 -> ~0.9 MiB/buffer in bf16


def conv_gemm_bias_relu(w_flat, b_col, patches):
    c_out, k = w_flat.shape
    k2, npix = patches.shape
    assert k == k2, (k, k2)
    tn = npix if npix <= _COL_TILE else _COL_TILE
    grid = (pl.cdiv(npix, tn),)
    return pl.pallas_call(
        _conv_gemm_kernel,
        out_shape=jax.ShapeDtypeStruct((c_out, npix), jnp.bfloat16),
        grid=grid,
        in_specs=[
            pl.BlockSpec((c_out, k), lambda j: (0, 0)),
            pl.BlockSpec((c_out, 1), lambda j: (0, 0)),
            pl.BlockSpec((k, tn), lambda j: (0, j)),
        ],
        out_specs=pl.BlockSpec((c_out, tn), lambda j: (0, j)),
        compiler_params=pltpu.CompilerParams(
            dimension_semantics=("parallel",)),
    )(w_flat, b_col, patches)


# ----------------------------------------------------------------------------
# Pallas kernel 2: fused  out = relu(x @ Wfc + bfc) @ Wcls + bcls
#   x    : (tile, 1536) bf16   Wfc : (1536, 128) bf16   Wcls : (128, 16) bf16
#   out  : (tile, 16)   f32    (biases f32; f32 accumulation throughout)
# ----------------------------------------------------------------------------
def _fc_cls_kernel(x_ref, wf_ref, bf_ref, wc_ref, bc_ref, o_ref):
    h = jnp.dot(x_ref[...], wf_ref[...], preferred_element_type=jnp.float32)
    h = jnp.maximum(h + bf_ref[...], 0.0)
    o = jnp.dot(h.astype(jnp.bfloat16), wc_ref[...],
                preferred_element_type=jnp.float32)
    o_ref[...] = o + bc_ref[...]


_ROW_TILE = 512


def fc_cls_fused(x, w_fc, b_fc, w_cls, b_cls):
    n, k = x.shape
    n_cls = w_cls.shape[1]
    tm = n if n <= _ROW_TILE else _ROW_TILE
    grid = (pl.cdiv(n, tm),)
    return pl.pallas_call(
        _fc_cls_kernel,
        out_shape=jax.ShapeDtypeStruct((n, n_cls), jnp.float32),
        grid=grid,
        in_specs=[
            pl.BlockSpec((tm, k), lambda i: (i, 0)),
            pl.BlockSpec(w_fc.shape, lambda i: (0, 0)),
            pl.BlockSpec(b_fc.shape, lambda i: (0, 0)),
            pl.BlockSpec(w_cls.shape, lambda i: (0, 0)),
            pl.BlockSpec(b_cls.shape, lambda i: (0, 0)),
        ],
        out_specs=pl.BlockSpec((tm, n_cls), lambda i: (i, 0)),
        compiler_params=pltpu.CompilerParams(
            dimension_semantics=("parallel",)),
    )(x, w_fc, b_fc, w_cls, b_cls)


# ----------------------------------------------------------------------------
# Glue: im2col in CNHW layout (pad + strided slices + stack; NO transposes).
# Row order of patches is (c_in, kh, kw) -> matches PyTorch weight flatten.
# Column order is (n, ho, wo) -> output reshape is directly next layer's CNHW.
# ----------------------------------------------------------------------------
def _im2col_cnhw(x_cnhw, kh=3, kw=3, stride=2, pad=1):
    c, n, h, w = x_cnhw.shape
    ho = (h + 2 * pad - kh) // stride + 1
    wo = (w + 2 * pad - kw) // stride + 1
    xp = jnp.pad(x_cnhw, ((0, 0), (0, 0), (pad, pad), (pad, pad)))
    taps = [xp[:, :, dy:dy + stride * ho:stride, dx:dx + stride * wo:stride]
            for dy in range(kh) for dx in range(kw)]
    p = jnp.stack(taps, axis=1)                       # (C, 9, N, Ho, Wo)
    return p.reshape(c * kh * kw, n * ho * wo), ho, wo


# ----------------------------------------------------------------------------
# Parameters
# ----------------------------------------------------------------------------
def init_params(key):
    ks = jax.random.split(key, 10)

    def w(k, shape, fan_in):
        return jax.random.normal(k, shape, jnp.float32) / jnp.sqrt(fan_in)

    return {
        "conv1_w": w(ks[0], (6, 3, 3, 3), 3 * 9),
        "conv1_b": w(ks[1], (6,), 3 * 9),
        "conv2_w": w(ks[2], (12, 6, 3, 3), 6 * 9),
        "conv2_b": w(ks[3], (12,), 6 * 9),
        "conv3_w": w(ks[4], (24, 12, 3, 3), 12 * 9),
        "conv3_b": w(ks[5], (24,), 12 * 9),
        "fc_w": w(ks[6], (128, 1536), 1536),    # PyTorch Linear layout (out, in)
        "fc_b": w(ks[7], (128,), 1536),
        "cls_w": w(ks[8], (16, 128), 128),
        "cls_b": w(ks[9], (16,), 128),
    }


def prepare_params(p):
    """One-time (outside jit): flatten / transpose / cast weights into the
    kernel-friendly layout so the forward pass has no weight transposes."""
    out = {}
    for i in (1, 2, 3):
        wname, bname = f"conv{i}_w", f"conv{i}_b"
        c_out = p[wname].shape[0]
        out[wname] = p[wname].reshape(c_out, -1).astype(jnp.bfloat16)  # (C_out, C_in*9)
        out[bname] = p[bname].reshape(c_out, 1).astype(jnp.float32)
    out["fc_w"] = p["fc_w"].T.astype(jnp.bfloat16)       # (1536, 128)
    out["fc_b"] = p["fc_b"].reshape(1, -1).astype(jnp.float32)
    out["cls_w"] = p["cls_w"].T.astype(jnp.bfloat16)     # (128, 16)
    out["cls_b"] = p["cls_b"].reshape(1, -1).astype(jnp.float32)
    return out


# ----------------------------------------------------------------------------
# Forward (same semantics as the PyTorch module; bf16 matmul operands with
# f32 accumulation, f32 logits out)
# ----------------------------------------------------------------------------
def animal_baseline_forward(params, x):
    # x.contiguous().view(-1, 3, 64, 64).float()
    x = x.reshape(-1, 3, 64, 64).astype(jnp.bfloat16)
    n = x.shape[0]
    x = x.transpose(1, 0, 2, 3)                       # CNHW: (3, N, 64, 64)
    for i in (1, 2, 3):
        patches, ho, wo = _im2col_cnhw(x)             # (C_in*9, N*Ho*Wo)
        y = conv_gemm_bias_relu(params[f"conv{i}_w"], params[f"conv{i}_b"],
                                patches)              # (C_out, N*Ho*Wo)
        x = y.reshape(y.shape[0], n, ho, wo)          # stays CNHW, no transpose
    # torch flatten order (N, C*H*W): one tiny (24,N,8,8)->(N,24,8,8) transpose
    x = x.transpose(1, 0, 2, 3).reshape(n, -1)        # (N, 1536) bf16
    return fc_cls_fused(x, params["fc_w"], params["fc_b"],
                        params["cls_w"], params["cls_b"])


if __name__ == "__main__":
    key = jax.random.PRNGKey(0)
    k_param, k_x = jax.random.split(key)
    params = prepare_params(init_params(k_param))      # one-time, outside jit
    x = jax.random.normal(k_x, (2, 3, 64, 64), jnp.float32)

    fwd = jax.jit(animal_baseline_forward)
    out = jax.block_until_ready(fwd(params, x))
    assert out.shape == (2, 16), out.shape
    assert out.dtype == jnp.float32
    print("KERNEL_OK")
</pallas_src>

<mosaic_0001>
module attributes {stable_mosaic.version = 11 : i64} {
  func.func @_conv_gemm_kernel(%arg0: i32, %arg1: memref<6x27xbf16, #tpu.memory_space<vmem>>, %arg2: memref<6x1xf32, #tpu.memory_space<vmem>>, %arg3: memref<27x2048xbf16, #tpu.memory_space<vmem>>, %arg4: memref<6x2048xbf16, #tpu.memory_space<vmem>>) attributes {dimension_semantics = [#tpu.dimension_semantics<parallel>], iteration_bounds = array<i64: 1>, scalar_prefetch = 0 : i64, scratch_operands = 0 : i64, tpu.core_type = #tpu.core_type<tc>, window_params = [{pipeline_mode = #tpu.pipeline_mode<synchronous>, transform_indices = @transform_0, window_bounds = array<i64: 6, 27>}, {pipeline_mode = #tpu.pipeline_mode<synchronous>, transform_indices = @transform_1, window_bounds = array<i64: 6, 1>}, {transform_indices = @transform_2, window_bounds = array<i64: 27, 2048>}, {transform_indices = @transform_3, window_bounds = array<i64: 6, 2048>}]} {
    %c0 = arith.constant 0 : index
    %c0_0 = arith.constant 0 : index
    %0 = vector.load %arg1[%c0, %c0_0] : memref<6x27xbf16, #tpu.memory_space<vmem>>, vector<6x27xbf16>
    %c0_1 = arith.constant 0 : index
    %c0_2 = arith.constant 0 : index
    %1 = vector.load %arg3[%c0_1, %c0_2] : memref<27x2048xbf16, #tpu.memory_space<vmem>>, vector<27x2048xbf16>
    %cst = arith.constant dense<0.000000e+00> : vector<6x2048xf32>
    %2 = tpu.matmul %0, %1, %cst {dimension_numbers = #tpu.dot_dimension_numbers<[1], [0], [0], [1], [0, 0, 1, 1], [], []>} : vector<6x27xbf16>, vector<27x2048xbf16>, vector<6x2048xf32> -> vector<6x2048xf32>
    %c0_3 = arith.constant 0 : index
    %c0_4 = arith.constant 0 : index
    %3 = vector.load %arg2[%c0_3, %c0_4] : memref<6x1xf32, #tpu.memory_space<vmem>>, vector<6x1xf32>
    %4 = vector.broadcast %3 : vector<6x1xf32> to vector<6x2048xf32>
    %5 = arith.addf %2, %4 : vector<6x2048xf32>
    %cst_5 = arith.constant 0.000000e+00 : f32
    %6 = vector.broadcast %cst_5 : f32 to vector<6x2048xf32>
    %7 = arith.maximumf %5, %6 : vector<6x2048xf32>
    %8 = arith.truncf %7 : vector<6x2048xf32> to vector<6x2048xbf16>
    %c0_6 = arith.constant 0 : index
    %c0_7 = arith.constant 0 : index
    %9 = vector.load %arg4[%c0_6, %c0_7] : memref<6x2048xbf16, #tpu.memory_space<vmem>>, vector<6x2048xbf16>
    tpu.vector_store %arg4[%c0_6, %c0_7], %8 {strides = array<i32>} : memref<6x2048xbf16, #tpu.memory_space<vmem>>, vector<6x2048xbf16>,
    return
  }
  func.func @transform_0(%arg0: i32) -> (i32, i32) {
    %c0_i32 = arith.constant 0 : i32
    %c0_i32_0 = arith.constant 0 : i32
    %c0_i32_1 = arith.constant 0 : i32
    return %c0_i32, %c0_i32_0 : i32, i32
  }
  func.func @transform_1(%arg0: i32) -> (i32, i32) {
    %c0_i32 = arith.constant 0 : i32
    %c0_i32_0 = arith.constant 0 : i32
    %c0_i32_1 = arith.constant 0 : i32
    return %c0_i32, %c0_i32_0 : i32, i32
  }
  func.func @transform_2(%arg0: i32) -> (i32, i32) {
    %c0_i32 = arith.constant 0 : i32
    %c0_i32_0 = arith.constant 0 : i32
    return %c0_i32, %arg0 : i32, i32
  }
  func.func @transform_3(%arg0: i32) -> (i32, i32) {
    %c0_i32 = arith.constant 0 : i32
    %c0_i32_0 = arith.constant 0 : i32
    return %c0_i32, %arg0 : i32, i32
  }
}

module attributes {stable_mosaic.version = 11 : i64} {
  func.func @_conv_gemm_kernel(%arg0: i32, %arg1: memref<12x54xbf16, #tpu.memory_space<vmem>>, %arg2: memref<12x1xf32, #tpu.memory_space<vmem>>, %arg3: memref<54x512xbf16, #tpu.memory_space<vmem>>, %arg4: memref<12x512xbf16, #tpu.memory_space<vmem>>) attributes {dimension_semantics = [#tpu.dimension_semantics<parallel>], iteration_bounds = array<i64: 1>, scalar_prefetch = 0 : i64, scratch_operands = 0 : i64, tpu.core_type = #tpu.core_type<tc>, window_params = [{pipeline_mode = #tpu.pipeline_mode<synchronous>, transform_indices = @transform_0, window_bounds = array<i64: 12, 54>}, {pipeline_mode = #tpu.pipeline_mode<synchronous>, transform_indices = @transform_1, window_bounds = array<i64: 12, 1>}, {transform_indices = @transform_2, window_bounds = array<i64: 54, 512>}, {transform_indices = @transform_3, window_bounds = array<i64: 12, 512>}]} {
    %c0 = arith.constant 0 : index
    %c0_0 = arith.constant 0 : index
    %0 = vector.load %arg1[%c0, %c0_0] : memref<12x54xbf16, #tpu.memory_space<vmem>>, vector<12x54xbf16>
    %c0_1 = arith.constant 0 : index
    %c0_2 = arith.constant 0 : index
    %1 = vector.load %arg3[%c0_1, %c0_2] : memref<54x512xbf16, #tpu.memory_space<vmem>>, vector<54x512xbf16>
    %cst = arith.constant dense<0.000000e+00> : vector<12x512xf32>
    %2 = tpu.matmul %0, %1, %cst {dimension_numbers = #tpu.dot_dimension_numbers<[1], [0], [0], [1], [0, 0, 1, 1], [], []>} : vector<12x54xbf16>, vector<54x512xbf16>, vector<12x512xf32> -> vector<12x512xf32>
    %c0_3 = arith.constant 0 : index
    %c0_4 = arith.constant 0 : index
    %3 = vector.load %arg2[%c0_3, %c0_4] : memref<12x1xf32, #tpu.memory_space<vmem>>, vector<12x1xf32>
    %4 = vector.broadcast %3 : vector<12x1xf32> to vector<12x512xf32>
    %5 = arith.addf %2, %4 : vector<12x512xf32>
    %cst_5 = arith.constant 0.000000e+00 : f32
    %6 = vector.broadcast %cst_5 : f32 to vector<12x512xf32>
    %7 = arith.maximumf %5, %6 : vector<12x512xf32>
    %8 = arith.truncf %7 : vector<12x512xf32> to vector<12x512xbf16>
    %c0_6 = arith.constant 0 : index
    %c0_7 = arith.constant 0 : index
    %9 = vector.load %arg4[%c0_6, %c0_7] : memref<12x512xbf16, #tpu.memory_space<vmem>>, vector<12x512xbf16>
    tpu.vector_store %arg4[%c0_6, %c0_7], %8 {strides = array<i32>} : memref<12x512xbf16, #tpu.memory_space<vmem>>, vector<12x512xbf16>,
    return
  }
  func.func @transform_0(%arg0: i32) -> (i32, i32) {
    %c0_i32 = arith.constant 0 : i32
    %c0_i32_0 = arith.constant 0 : i32
    %c0_i32_1 = arith.constant 0 : i32
    return %c0_i32, %c0_i32_0 : i32, i32
  }
  func.func @transform_1(%arg0: i32) -> (i32, i32) {
    %c0_i32 = arith.constant 0 : i32
    %c0_i32_0 = arith.constant 0 : i32
    %c0_i32_1 = arith.constant 0 : i32
    return %c0_i32, %c0_i32_0 : i32, i32
  }
  func.func @transform_2(%arg0: i32) -> (i32, i32) {
    %c0_i32 = arith.constant 0 : i32
    %c0_i32_0 = arith.constant 0 : i32
    return %c0_i32, %arg0 : i32, i32
  }
  func.func @transform_3(%arg0: i32) -> (i32, i32) {
    %c0_i32 = arith.constant 0 : i32
    %c0_i32_0 = arith.constant 0 : i32
    return %c0_i32, %arg0 : i32, i32
  }
}

module attributes {stable_mosaic.version = 11 : i64} {
  func.func @_conv_gemm_kernel(%arg0: i32, %arg1: memref<24x108xbf16, #tpu.memory_space<vmem>>, %arg2: memref<24x1xf32, #tpu.memory_space<vmem>>, %arg3: memref<108x128xbf16, #tpu.memory_space<vmem>>, %arg4: memref<24x128xbf16, #tpu.memory_space<vmem>>) attributes {dimension_semantics = [#tpu.dimension_semantics<parallel>], iteration_bounds = array<i64: 1>, scalar_prefetch = 0 : i64, scratch_operands = 0 : i64, tpu.core_type = #tpu.core_type<tc>, window_params = [{pipeline_mode = #tpu.pipeline_mode<synchronous>, transform_indices = @transform_0, window_bounds = array<i64: 24, 108>}, {pipeline_mode = #tpu.pipeline_mode<synchronous>, transform_indices = @transform_1, window_bounds = array<i64: 24, 1>}, {transform_indices = @transform_2, window_bounds = array<i64: 108, 128>}, {transform_indices = @transform_3, window_bounds = array<i64: 24, 128>}]} {
    %c0 = arith.constant 0 : index
    %c0_0 = arith.constant 0 : index
    %0 = vector.load %arg1[%c0, %c0_0] : memref<24x108xbf16, #tpu.memory_space<vmem>>, vector<24x108xbf16>
    %c0_1 = arith.constant 0 : index
    %c0_2 = arith.constant 0 : index
    %1 = vector.load %arg3[%c0_1, %c0_2] : memref<108x128xbf16, #tpu.memory_space<vmem>>, vector<108x128xbf16>
    %cst = arith.constant dense<0.000000e+00> : vector<24x128xf32>
    %2 = tpu.matmul %0, %1, %cst {dimension_numbers = #tpu.dot_dimension_numbers<[1], [0], [0], [1], [0, 0, 1, 1], [], []>} : vector<24x108xbf16>, vector<108x128xbf16>, vector<24x128xf32> -> vector<24x128xf32>
    %c0_3 = arith.constant 0 : index
    %c0_4 = arith.constant 0 : index
    %3 = vector.load %arg2[%c0_3, %c0_4] : memref<24x1xf32, #tpu.memory_space<vmem>>, vector<24x1xf32>
    %4 = vector.broadcast %3 : vector<24x1xf32> to vector<24x128xf32>
    %5 = arith.addf %2, %4 : vector<24x128xf32>
    %cst_5 = arith.constant 0.000000e+00 : f32
    %6 = vector.broadcast %cst_5 : f32 to vector<24x128xf32>
    %7 = arith.maximumf %5, %6 : vector<24x128xf32>
    %8 = arith.truncf %7 : vector<24x128xf32> to vector<24x128xbf16>
    %c0_6 = arith.constant 0 : index
    %c0_7 = arith.constant 0 : index
    %9 = vector.load %arg4[%c0_6, %c0_7] : memref<24x128xbf16, #tpu.memory_space<vmem>>, vector<24x128xbf16>
    tpu.vector_store %arg4[%c0_6, %c0_7], %8 {strides = array<i32>} : memref<24x128xbf16, #tpu.memory_space<vmem>>, vector<24x128xbf16>,
    return
  }
  func.func @transform_0(%arg0: i32) -> (i32, i32) {
    %c0_i32 = arith.constant 0 : i32
    %c0_i32_0 = arith.constant 0 : i32
    %c0_i32_1 = arith.constant 0 : i32
    return %c0_i32, %c0_i32_0 : i32, i32
  }
  func.func @transform_1(%arg0: i32) -> (i32, i32) {
    %c0_i32 = arith.constant 0 : i32
    %c0_i32_0 = arith.constant 0 : i32
    %c0_i32_1 = arith.constant 0 : i32
    return %c0_i32, %c0_i32_0 : i32, i32
  }
  func.func @transform_2(%arg0: i32) -> (i32, i32) {
    %c0_i32 = arith.constant 0 : i32
    %c0_i32_0 = arith.constant 0 : i32
    return %c0_i32, %arg0 : i32, i32
  }
  func.func @transform_3(%arg0: i32) -> (i32, i32) {
    %c0_i32 = arith.constant 0 : i32
    %c0_i32_0 = arith.constant 0 : i32
    return %c0_i32, %arg0 : i32, i32
  }
}

module attributes {stable_mosaic.version = 11 : i64} {
  func.func @_fc_cls_kernel(%arg0: i32, %arg1: memref<2x1536xbf16, #tpu.memory_space<vmem>>, %arg2: memref<1536x128xbf16, #tpu.memory_space<vmem>>, %arg3: memref<1x128xf32, #tpu.memory_space<vmem>>, %arg4: memref<128x16xbf16, #tpu.memory_space<vmem>>, %arg5: memref<1x16xf32, #tpu.memory_space<vmem>>, %arg6: memref<2x16xf32, #tpu.memory_space<vmem>>) attributes {dimension_semantics = [#tpu.dimension_semantics<parallel>], iteration_bounds = array<i64: 1>, scalar_prefetch = 0 : i64, scratch_operands = 0 : i64, tpu.core_type = #tpu.core_type<tc>, window_params = [{transform_indices = @transform_0, window_bounds = array<i64: 2, 1536>}, {pipeline_mode = #tpu.pipeline_mode<synchronous>, transform_indices = @transform_1, window_bounds = array<i64: 1536, 128>}, {pipeline_mode = #tpu.pipeline_mode<synchronous>, transform_indices = @transform_2, window_bounds = array<i64: 1, 128>}, {pipeline_mode = #tpu.pipeline_mode<synchronous>, transform_indices = @transform_3, window_bounds = array<i64: 128, 16>}, {pipeline_mode = #tpu.pipeline_mode<synchronous>, transform_indices = @transform_4, window_bounds = array<i64: 1, 16>}, {transform_indices = @transform_5, window_bounds = array<i64: 2, 16>}]} {
    %c0 = arith.constant 0 : index
    %c0_0 = arith.constant 0 : index
    %0 = vector.load %arg1[%c0, %c0_0] : memref<2x1536xbf16, #tpu.memory_space<vmem>>, vector<2x1536xbf16>
    %c0_1 = arith.constant 0 : index
    %c0_2 = arith.constant 0 : index
    %1 = vector.load %arg2[%c0_1, %c0_2] : memref<1536x128xbf16, #tpu.memory_space<vmem>>, vector<1536x128xbf16>
    %cst = arith.constant dense<0.000000e+00> : vector<2x128xf32>
    %2 = tpu.matmul %0, %1, %cst {dimension_numbers = #tpu.dot_dimension_numbers<[1], [0], [0], [1], [0, 0, 1, 1], [], []>} : vector<2x1536xbf16>, vector<1536x128xbf16>, vector<2x128xf32> -> vector<2x128xf32>
    %c0_3 = arith.constant 0 : index
    %c0_4 = arith.constant 0 : index
    %3 = vector.load %arg3[%c0_3, %c0_4] : memref<1x128xf32, #tpu.memory_space<vmem>>, vector<1x128xf32>
    %4 = vector.broadcast %3 : vector<1x128xf32> to vector<2x128xf32>
    %5 = arith.addf %2, %4 : vector<2x128xf32>
    %cst_5 = arith.constant 0.000000e+00 : f32
    %6 = vector.broadcast %cst_5 : f32 to vector<2x128xf32>
    %7 = arith.maximumf %5, %6 : vector<2x128xf32>
    %8 = arith.truncf %7 : vector<2x128xf32> to vector<2x128xbf16>
    %c0_6 = arith.constant 0 : index
    %c0_7 = arith.constant 0 : index
    %9 = vector.load %arg4[%c0_6, %c0_7] : memref<128x16xbf16, #tpu.memory_space<vmem>>, vector<128x16xbf16>
    %cst_8 = arith.constant dense<0.000000e+00> : vector<2x16xf32>
    %10 = tpu.matmul %8, %9, %cst_8 {dimension_numbers = #tpu.dot_dimension_numbers<[1], [0], [0], [1], [0, 0, 1, 1], [], []>} : vector<2x128xbf16>, vector<128x16xbf16>, vector<2x16xf32> -> vector<2x16xf32>
    %c0_9 = arith.constant 0 : index
    %c0_10 = arith.constant 0 : index
    %11 = vector.load %arg5[%c0_9, %c0_10] : memref<1x16xf32, #tpu.memory_space<vmem>>, vector<1x16xf32>
    %12 = vector.broadcast %11 : vector<1x16xf32> to vector<2x16xf32>
    %13 = arith.addf %10, %12 : vector<2x16xf32>
    %c0_11 = arith.constant 0 : index
    %c0_12 = arith.constant 0 : index
    %14 = vector.load %arg6[%c0_11, %c0_12] : memref<2x16xf32, #tpu.memory_space<vmem>>, vector<2x16xf32>
    tpu.vector_store %arg6[%c0_11, %c0_12], %13 {strides = array<i32>} : memref<2x16xf32, #tpu.memory_space<vmem>>, vector<2x16xf32>,
    return
  }
  func.func @transform_0(%arg0: i32) -> (i32, i32) {
    %c0_i32 = arith.constant 0 : i32
    %c0_i32_0 = arith.constant 0 : i32
    return %arg0, %c0_i32 : i32, i32
  }
  func.func @transform_1(%arg0: i32) -> (i32, i32) {
    %c0_i32 = arith.constant 0 : i32
    %c0_i32_0 = arith.constant 0 : i32
    %c0_i32_1 = arith.constant 0 : i32
    return %c0_i32, %c0_i32_0 : i32, i32
  }
  func.func @transform_2(%arg0: i32) -> (i32, i32) {
    %c0_i32 = arith.constant 0 : i32
    %c0_i32_0 = arith.constant 0 : i32
    %c0_i32_1 = arith.constant 0 : i32
    return %c0_i32, %c0_i32_0 : i32, i32
  }
  func.func @transform_3(%arg0: i32) -> (i32, i32) {
    %c0_i32 = arith.constant 0 : i32
    %c0_i32_0 = arith.constant 0 : i32
    %c0_i32_1 = arith.constant 0 : i32
    return %c0_i32, %c0_i32_0 : i32, i32
  }
  func.func @transform_4(%arg0: i32) -> (i32, i32) {
    %c0_i32 = arith.constant 0 : i32
    %c0_i32_0 = arith.constant 0 : i32
    %c0_i32_1 = arith.constant 0 : i32
    return %c0_i32, %c0_i32_0 : i32, i32
  }
  func.func @transform_5(%arg0: i32) -> (i32, i32) {
    %c0_i32 = arith.constant 0 : i32
    %c0_i32_0 = arith.constant 0 : i32
    return %arg0, %c0_i32 : i32, i32
  }
}

</mosaic_0001>

<llo_original>
// kernel: animal_baseline_forward.4
$region0: #{animal_baseline_forward.4}
  #allocation0 [shape = 'u32[]', space=smem, size = 0x4, offset = 0x4, fixed_abs, tag = 'smem constant byte address 0x4 - core index']
  #allocation1 [shape = 'u32[144,128]{1,0:T(1,128)}', space=vmem, size = 0x12000, scoped, tag = 'internal scratch']
  %s0 = inlined_call_operand.vmem [shape: bf16[6,27], index: 0, kind: input, shape index: {}]
  %s1 = inlined_call_operand.vmem [shape: f32[6,1], index: 1, kind: input, shape index: {}]
  %s2 = inlined_call_operand.vmem [shape: bf16[27,2048], index: 2, kind: input, shape index: {}]
  %s3 = inlined_call_operand.vmem [shape: bf16[6,2048], index: 3, kind: output, shape index: {}]
  %s4 = sld [smem:[#allocation0]]
  $region22: #{animal_baseline_forward.4} parent=0
    _
  %s6 = ssub.s32 1, %s4
  %s7 = scalar_select 0, %s6, %s4
  // Predicated region
  $region2: #{animal_baseline_forward.4} parent=0 // pred_check
    _
  $region3: #{animal_baseline_forward.4} parent=0 // pred_check_branch
    %9 = sbr.rel (0) target = $region5
  $region4: #{animal_baseline_forward.4} parent=0 // pred_region
    _
  $region5: #{animal_baseline_forward.4} parent=0 // pred_fallthru
    _
  // Predicated region
  $region6: #{animal_baseline_forward.4} parent=0 // pred_check
    _
  $region7: #{animal_baseline_forward.4} parent=0 // pred_check_branch
    %11 = sbr.rel (0) target = $region9
  $region8: #{animal_baseline_forward.4} parent=0 // pred_region
    _
  $region9: #{animal_baseline_forward.4} parent=0 // pred_fallthru
    _
  // Predicated region
  $region10: #{animal_baseline_forward.4} parent=0 // pred_check
    _
  $region11: #{animal_baseline_forward.4} parent=0 // pred_check_branch
    %13 = sbr.rel (0) target = $region13
  $region12: #{animal_baseline_forward.4} parent=0 // pred_region
    _
  $region13: #{animal_baseline_forward.4} parent=0 // pred_fallthru
    _
  %v15 = vld [vmem:[%s0] sm:$0x7]
  %v16 = vld [vmem:[%s2] sm:$0xff]
  %v17 = vld [vmem:[%s2 + $0x8] sm:$0xff]
  %v18 = vld [vmem:[%s2 + $0x10] sm:$0xff]
  %v19 = vld [vmem:[%s2 + $0x18] sm:$0xff]
  %v20 = vld [vmem:[%s2 + $0x20] sm:$0xff]
  %v21 = vld [vmem:[%s2 + $0x28] sm:$0xff]
  %v22 = vld [vmem:[%s2 + $0x30] sm:$0xff]
  %v23 = vld [vmem:[%s2 + $0x38] sm:$0xff]
  %v24 = vld [vmem:[%s2 + $0x40] sm:$0xff]
  %v25 = vld [vmem:[%s2 + $0x48] sm:$0xff]
  %v26 = vld [vmem:[%s2 + $0x50] sm:$0xff]
  %v27 = vld [vmem:[%s2 + $0x58] sm:$0xff]
  %v28 = vld [vmem:[%s2 + $0x60] sm:$0xff]
  %v29 = vld [vmem:[%s2 + $0x68] sm:$0xff]
  %v30 = vld [vmem:[%s2 + $0x70] sm:$0xff]
  %v31 = vld [vmem:[%s2 + $0x78] sm:$0xff]
  %v32 = vld [vmem:[%s2 + $0x80] sm:$0xff]
  %v33 = vld [vmem:[%s2 + $0x88] sm:$0xff]
  %v34 = vld [vmem:[%s2 + $0x90] sm:$0xff]
  %v35 = vld [vmem:[%s2 + $0x98] sm:$0xff]
  %v36 = vld [vmem:[%s2 + $0xa0] sm:$0xff]
  %v37 = vld [vmem:[%s2 + $0xa8] sm:$0xff]
  %v38 = vld [vmem:[%s2 + $0xb0] sm:$0xff]
  %v39 = vld [vmem:[%s2 + $0xb8] sm:$0xff]
  %v40 = vld [vmem:[%s2 + $0xc0] sm:$0x33]
  %v41 = vld [vmem:[%s2 + $0xc8] sm:$0x33]
  %v42 = vld [vmem:[%s2 + $0xd0] sm:$0x33]
  %v43 = vld [vmem:[%s2 + $0xd8] sm:$0x33]
  %v44 = vld [vmem:[%s2 + $0xe0] sm:$0x33]
  %v45 = vld [vmem:[%s2 + $0xe8] sm:$0x33]
  %v46 = vld [vmem:[%s2 + $0xf0] sm:$0x33]
  %v47 = vld [vmem:[%s2 + $0xf8] sm:$0x33]
  %v48 = vld [vmem:[%s1] sm:$0x3f]
  %50 = vset.pattern.permute.xlu0 0
  %51 = vperm.xlu0 %50, %v48
  %v52 = vpop.permute.xlu0 %51
  %v86 = vunpack.c.l.b16 %v16
  %v87 = vunpack.c.h.b16 %v16
  %v88 = vunpack.c.l.b16 %v17
  %v89 = vunpack.c.h.b16 %v17
  %v90 = vunpack.c.l.b16 %v18
  %v91 = vunpack.c.h.b16 %v18
  %v92 = vunpack.c.l.b16 %v19
  %v93 = vunpack.c.h.b16 %v19
  %v94 = vunpack.c.l.b16 %v20
  %v95 = vunpack.c.h.b16 %v20
  %v96 = vunpack.c.l.b16 %v21
  %v97 = vunpack.c.h.b16 %v21
  %v98 = vunpack.c.l.b16 %v22
  %v99 = vunpack.c.h.b16 %v22
  %v100 = vunpack.c.l.b16 %v23
  %v101 = vunpack.c.h.b16 %v23
  %v102 = vunpack.c.l.b16 %v24
  %v103 = vunpack.c.h.b16 %v24
  %v104 = vunpack.c.l.b16 %v25
  %v105 = vunpack.c.h.b16 %v25
  %v106 = vunpack.c.l.b16 %v26
  %v107 = vunpack.c.h.b16 %v26
  %v108 = vunpack.c.l.b16 %v27
  %v109 = vunpack.c.h.b16 %v27
  %v110 = vunpack.c.l.b16 %v28
  %v111 = vunpack.c.h.b16 %v28
  %v112 = vunpack.c.l.b16 %v29
  %v113 = vunpack.c.h.b16 %v29
  %v114 = vunpack.c.l.b16 %v30
  %v115 = vunpack.c.h.b16 %v30
  %v116 = vunpack.c.l.b16 %v31
  %v117 = vunpack.c.h.b16 %v31
  %v118 = vunpack.c.l.b16 %v32
  %v119 = vunpack.c.h.b16 %v32
  %v120 = vunpack.c.l.b16 %v33
  %v121 = vunpack.c.h.b16 %v33
  %v122 = vunpack.c.l.b16 %v34
  %v123 = vunpack.c.h.b16 %v34
  %v124 = vunpack.c.l.b16 %v35
  %v125 = vunpack.c.h.b16 %v35
  %v126 = vunpack.c.l.b16 %v36
  %v127 = vunpack.c.h.b16 %v36
  %v128 = vunpack.c.l.b16 %v37
  %v129 = vunpack.c.h.b16 %v37
  %v130 = vunpack.c.l.b16 %v38
  %v131 = vunpack.c.h.b16 %v38
  %v132 = vunpack.c.l.b16 %v39
  %v133 = vunpack.c.h.b16 %v39
  %v134 = vunpack.c.l.b16 %v40
  %v135 = vunpack.c.h.b16 %v40
  %v136 = vunpack.c.l.b16 %v41
  %v137 = vunpack.c.h.b16 %v41
  %v138 = vunpack.c.l.b16 %v42
  %v139 = vunpack.c.h.b16 %v42
  %v140 = vunpack.c.l.b16 %v43
  %v141 = vunpack.c.h.b16 %v43
  %v142 = vunpack.c.l.b16 %v44
  %v143 = vunpack.c.h.b16 %v44
  %v144 = vunpack.c.l.b16 %v45
  %v145 = vunpack.c.h.b16 %v45
  %v146 = vunpack.c.l.b16 %v46
  %v147 = vunpack.c.h.b16 %v46
  %v148 = vunpack.c.l.b16 %v47
  %v149 = vunpack.c.h.b16 %v47
  %v150 = vpack.c.b16 %v102, %v86
  %v151 = vpack.c.b16 %v103, %v87
  %v152 = vpack.c.b16 %v104, %v88
  %v153 = vpack.c.b16 %v105, %v89
  %v154 = vpack.c.b16 %v106, %v90
  %v155 = vpack.c.b16 %v107, %v91
  %v156 = vpack.c.b16 %v108, %v92
  %v157 = vpack.c.b16 %v109, %v93
  %v158 = vpack.c.b16 %v110, %v94
  %v159 = vpack.c.b16 %v111, %v95
  %v160 = vpack.c.b16 %v112, %v96
  %v161 = vpack.c.b16 %v113, %v97
  %v162 = vpack.c.b16 %v114, %v98
  %v163 = vpack.c.b16 %v115, %v99
  %v164 = vpack.c.b16 %v116, %v100
  %v165 = vpack.c.b16 %v117, %v101
  %v166 = vpack.c.b16 %v134, %v118
  %v167 = vpack.c.b16 %v135, %v119
  %v168 = vpack.c.b16 %v136, %v120
  %v169 = vpack.c.b16 %v137, %v121
  %v170 = vpack.c.b16 %v138, %v122
  %v171 = vpack.c.b16 %v139, %v123
  %v172 = vpack.c.b16 %v140, %v124
  %v173 = vpack.c.b16 %v141, %v125
  %v174 = vpack.c.b16 %v142, %v126
  %v175 = vpack.c.b16 %v143, %v127
  %v176 = vpack.c.b16 %v144, %v128
  %v177 = vpack.c.b16 %v145, %v129
  %v178 = vpack.c.b16 %v146, %v130
  %v179 = vpack.c.b16 %v147, %v131
  %v180 = vpack.c.b16 %v148, %v132
  %v181 = vpack.c.b16 %v149, %v133
  %vm198 = vcmask 220160
  %v200 = vsel %vm198, %v15, 0
  %vm202 = vcmask 1044480
  %vm203 = vcmask 1045504
  %v204 = vsel %vm202, 4294967295, 65535
  %v205 = vsel %vm203, %v204, 0
  %v207 = vand.u32 %v166, %v205
  %v210 = vand.u32 %v167, %v205
  %v213 = vand.u32 %v168, %v205
  %v216 = vand.u32 %v169, %v205
  %v219 = vand.u32 %v170, %v205
  %v222 = vand.u32 %v171, %v205
  %v225 = vand.u32 %v172, %v205
  %v228 = vand.u32 %v173, %v205
  %v231 = vand.u32 %v174, %v205
  %v234 = vand.u32 %v175, %v205
  %v237 = vand.u32 %v176, %v205
  %v240 = vand.u32 %v177, %v205
  %v243 = vand.u32 %v178, %v205
  %v246 = vand.u32 %v179, %v205
  %v249 = vand.u32 %v180, %v205
  %v252 = vand.u32 %v181, %v205
  %254 = vmatprep.subr.bf16.mxu0 0
  %255 = vmatpush1.bf16.msra.mxu0 0
  %256 = vmatprep.subr.bf16.mxu0 0
  %257 = vmatpush1.bf16.msra.mxu0 0
  %258 = vmatprep.subr.bf16.mxu0 0
  %259 = vmatpush1.bf16.msra.mxu0 0
  %260 = vmatprep.subr.bf16.mxu0 0
  %261 = vmatpush1.bf16.msra.mxu0 0
  %262 = vmatprep.subr.bf16.mxu0 0
  %263 = vmatpush1.bf16.msra.mxu0 0
  %264 = vmatprep.subr.bf16.mxu0 0
  %265 = vmatpush1.bf16.msra.mxu0 0
  %266 = vmatprep.subr.bf16.mxu0 %v210
  %267 = vmatpush1.bf16.msra.mxu0 %v207
  %268 = vmatprep.subr.bf16.mxu0 %v151
  %269 = vmatpush1.bf16.msra.mxu0 %v150
  %270 = vmatprep.subr.bf16.mxu0 0
  %271 = vmatpush2.bf16.msra.mxu0 0
  %272 = vmatprep.subr.bf16.mxu0 0
  %273 = vmatpush2.bf16.msra.mxu0 0
  %274 = vmatprep.subr.bf16.mxu0 0
  %275 = vmatpush2.bf16.msra.mxu0 0
  %276 = vmatprep.subr.bf16.mxu0 0
  %277 = vmatpush2.bf16.msra.mxu0 0
  %278 = vmatprep.subr.bf16.mxu0 0
  %279 = vmatpush2.bf16.msra.mxu0 0
  %280 = vmatprep.subr.bf16.mxu0 0
  %281 = vmatpush2.bf16.msra.mxu0 0
  %282 = vmatprep.subr.bf16.mxu0 0
  %283 = vmatpush2.bf16.msra.mxu0 0
  %284 = vmatprep.subr.bf16.mxu0 0
  %285 = vmatpush2.bf16.msra.mxu0 0
  %286 = vmatprep.mubr.bf16.mxu0 0
  %287 = vmatmul.mubr.bf16.gmra.mxu0 %v200
  %v288 = vpop.f32.mrf.mxu0
  %v289 = vadd.f32 %v52, %v288
  %v290 = vpop.f32.mrf.mxu0
  %v291 = vadd.f32 %v52, %v290
  %v292 = vpop.f32.mrf.mxu0
  %v293 = vpop.f32.mrf.mxu0
  %294 = vdwg.mxu0
  %295 = vmatprep.subr.bf16.mxu0 0
  %296 = vmatpush1.bf16.msra.mxu0 0
  %297 = vmatprep.subr.bf16.mxu0 0
  %298 = vmatpush1.bf16.msra.mxu0 0
  %299 = vmatprep.subr.bf16.mxu0 0
  %300 = vmatpush1.bf16.msra.mxu0 0
  %301 = vmatprep.subr.bf16.mxu0 0
  %302 = vmatpush1.bf16.msra.mxu0 0
  %303 = vmatprep.subr.bf16.mxu0 0
  %304 = vmatpush1.bf16.msra.mxu0 0
  %305 = vmatprep.subr.bf16.mxu0 0
  %306 = vmatpush1.bf16.msra.mxu0 0
  %307 = vmatprep.subr.bf16.mxu0 %v216
  %308 = vmatpush1.bf16.msra.mxu0 %v213
  %309 = vmatprep.subr.bf16.mxu0 %v153
  %310 = vmatpush1.bf16.msra.mxu0 %v152
  %311 = vmatprep.subr.bf16.mxu0 0
  %312 = vmatpush2.bf16.msra.mxu0 0
  %313 = vmatprep.subr.bf16.mxu0 0
  %314 = vmatpush2.bf16.msra.mxu0 0
  %315 = vmatprep.subr.bf16.mxu0 0
  %316 = vmatpush2.bf16.msra.mxu0 0
  %317 = vmatprep.subr.bf16.mxu0 0
  %318 = vmatpush2.bf16.msra.mxu0 0
  %319 = vmatprep.subr.bf16.mxu0 0
  %320 = vmatpush2.bf16.msra.mxu0 0
  %321 = vmatprep.subr.bf16.mxu0 0
  %322 = vmatpush2.bf16.msra.mxu0 0
  %323 = vmatprep.subr.bf16.mxu0 0
  %324 = vmatpush2.bf16.msra.mxu0 0
  %325 = vmatprep.subr.bf16.mxu0 0
  %326 = vmatpush2.bf16.msra.mxu0 0
  %327 = vmatprep.mubr.bf16.mxu0 0
  %328 = vmatmul.mubr.bf16.gmra.mxu0 %v200
  %v329 = vpop.f32.mrf.mxu0
  %v330 = vadd.f32 %v52, %v329
  %v331 = vpop.f32.mrf.mxu0
  %v332 = vadd.f32 %v52, %v331
  %v333 = vpop.f32.mrf.mxu0
  %v334 = vpop.f32.mrf.mxu0
  %335 = vdwg.mxu0
  %336 = vmatprep.subr.bf16.mxu0 0
  %337 = vmatpush1.bf16.msra.mxu0 0
  %338 = vmatprep.subr.bf16.mxu0 0
  %339 = vmatpush1.bf16.msra.mxu0 0
  %340 = vmatprep.subr.bf16.mxu0 0
  %341 = vmatpush1.bf16.msra.mxu0 0
  %342 = vmatprep.subr.bf16.mxu0 0
  %343 = vmatpush1.bf16.msra.mxu0 0
  %344 = vmatprep.subr.bf16.mxu0 0
  %345 = vmatpush1.bf16.msra.mxu0 0
  %346 = vmatprep.subr.bf16.mxu0 0
  %347 = vmatpush1.bf16.msra.mxu0 0
  %348 = vmatprep.subr.bf16.mxu0 %v222
  %349 = vmatpush1.bf16.msra.mxu0 %v219
  %350 = vmatprep.subr.bf16.mxu0 %v155
  %351 = vmatpush1.bf16.msra.mxu0 %v154
  %352 = vmatprep.subr.bf16.mxu0 0
  %353 = vmatpush2.bf16.msra.mxu0 0
  %354 = vmatprep.subr.bf16.mxu0 0
  %355 = vmatpush2.bf16.msra.mxu0 0
  %356 = vmatprep.subr.bf16.mxu0 0
  %357 = vmatpush2.bf16.msra.mxu0 0
  %358 = vmatprep.subr.bf16.mxu0 0
  %359 = vmatpush2.bf16.msra.mxu0 0
  %360 = vmatprep.subr.bf16.mxu0 0
  %361 = vmatpush2.bf16.msra.mxu0 0
  %362 = vmatprep.subr.bf16.mxu0 0
  %363 = vmatpush2.bf16.msra.mxu0 0
  %364 = vmatprep.subr.bf16.mxu0 0
  %365 = vmatpush2.bf16.msra.mxu0 0
  %366 = vmatprep.subr.bf16.mxu0 0
  %367 = vmatpush2.bf16.msra.mxu0 0
  %368 = vmatprep.mubr.bf16.mxu0 0
  %369 = vmatmul.mubr.bf16.gmra.mxu0 %v200
  %v370 = vpop.f32.mrf.mxu0
  %v371 = vadd.f32 %v52, %v370
  %v372 = vpop.f32.mrf.mxu0
  %v373 = vadd.f32 %v52, %v372
  %v374 = vpop.f32.mrf.mxu0
  %v375 = vpop.f32.mrf.mxu0
  %376 = vdwg.mxu0
  %377 = vmatprep.subr.bf16.mxu0 0
  %378 = vmatpush1.bf16.msra.mxu0 0
  %379 = vmatprep.subr.bf16.mxu0 0
  %380 = vmatpush1.bf16.msra.mxu0 0
  %381 = vmatprep.subr.bf16.mxu0 0
  %382 = vmatpush1.bf16.msra.mxu0 0
  %383 = vmatprep.subr.bf16.mxu0 0
  %384 = vmatpush1.bf16.msra.mxu0 0
  %385 = vmatprep.subr.bf16.mxu0 0
  %386 = vmatpush1.bf16.msra.mxu0 0
  %387 = vmatprep.subr.bf16.mxu0 0
  %388 = vmatpush1.bf16.msra.mxu0 0
  %389 = vmatprep.subr.bf16.mxu0 %v228
  %390 = vmatpush1.bf16.msra.mxu0 %v225
  %391 = vmatprep.subr.bf16.mxu0 %v157
  %392 = vmatpush1.bf16.msra.mxu0 %v156
  %393 = vmatprep.subr.bf16.mxu0 0
  %394 = vmatpush2.bf16.msra.mxu0 0
  %395 = vmatprep.subr.bf16.mxu0 0
  %396 = vmatpush2.bf16.msra.mxu0 0
  %397 = vmatprep.subr.bf16.mxu0 0
  %398 = vmatpush2.bf16.msra.mxu0 0
  %399 = vmatprep.subr.bf16.mxu0 0
  %400 = vmatpush2.bf16.msra.mxu0 0
  %401 = vmatprep.subr.bf16.mxu0 0
  %402 = vmatpush2.bf16.msra.mxu0 0
  %403 = vmatprep.subr.bf16.mxu0 0
  %404 = vmatpush2.bf16.msra.mxu0 0
  %405 = vmatprep.subr.bf16.mxu0 0
  %406 = vmatpush2.bf16.msra.mxu0 0
  %407 = vmatprep.subr.bf16.mxu0 0
  %408 = vmatpush2.bf16.msra.mxu0 0
  %409 = vmatprep.mubr.bf16.mxu0 0
  %410 = vmatmul.mubr.bf16.gmra.mxu0 %v200
  %v411 = vpop.f32.mrf.mxu0
  %v412 = vadd.f32 %v52, %v411
  %v413 = vpop.f32.mrf.mxu0
  %v414 = vadd.f32 %v52, %v413
  %v415 = vpop.f32.mrf.mxu0
  %v416 = vpop.f32.mrf.mxu0
  %417 = vdwg.mxu0
  %418 = vmatprep.subr.bf16.mxu0 0
  %419 = vmatpush1.bf16.msra.mxu0 0
  %420 = vmatprep.subr.bf16.mxu0 0
  %421 = vmatpush1.bf16.msra.mxu0 0
  %422 = vmatprep.subr.bf16.mxu0 0
  %423 = vmatpush1.bf16.msra.mxu0 0
  %424 = vmatprep.subr.bf16.mxu0 0
  %425 = vmatpush1.bf16.msra.mxu0 0
  %426 = vmatprep.subr.bf16.mxu0 0
  %427 = vmatpush1.bf16.msra.mxu0 0
  %428 = vmatprep.subr.bf16.mxu0 0
  %429 = vmatpush1.bf16.msra.mxu0 0
  %430 = vmatprep.subr.bf16.mxu0 %v234
  %431 = vmatpush1.bf16.msra.mxu0 %v231
  %432 = vmatprep.subr.bf16.mxu0 %v159
  %433 = vmatpush1.bf16.msra.mxu0 %v158
  %434 = vmatprep.subr.bf16.mxu0 0
  %435 = vmatpush2.bf16.msra.mxu0 0
  %436 = vmatprep.subr.bf16.mxu0 0
  %437 = vmatpush2.bf16.msra.mxu0 0
  %438 = vmatprep.subr.bf16.mxu0 0
  %439 = vmatpush2.bf16.msra.mxu0 0
  %440 = vmatprep.subr.bf16.mxu0 0
  %441 = vmatpush2.bf16.msra.mxu0 0
  %442 = vmatprep.subr.bf16.mxu0 0
  %443 = vmatpush2.bf16.msra.mxu0 0
  %444 = vmatprep.subr.bf16.mxu0 0
  %445 = vmatpush2.bf16.msra.mxu0 0
  %446 = vmatprep.subr.bf16.mxu0 0
  %447 = vmatpush2.bf16.msra.mxu0 0
  %448 = vmatprep.subr.bf16.mxu0 0
  %449 = vmatpush2.bf16.msra.mxu0 0
  %450 = vmatprep.mubr.bf16.mxu0 0
  %451 = vmatmul.mubr.bf16.gmra.mxu0 %v200
  %v452 = vpop.f32.mrf.mxu0
  %v453 = vadd.f32 %v52, %v452
  %v454 = vpop.f32.mrf.mxu0
  %v455 = vadd.f32 %v52, %v454
  %v456 = vpop.f32.mrf.mxu0
  %v457 = vpop.f32.mrf.mxu0
  %458 = vdwg.mxu0
  %459 = vmatprep.subr.bf16.mxu0 0
  %460 = vmatpush1.bf16.msra.mxu0 0
  %461 = vmatprep.subr.bf16.mxu0 0
  %462 = vmatpush1.bf16.msra.mxu0 0
  %463 = vmatprep.subr.bf16.mxu0 0
  %464 = vmatpush1.bf16.msra.mxu0 0
  %465 = vmatprep.subr.bf16.mxu0 0
  %466 = vmatpush1.bf16.msra.mxu0 0
  %467 = vmatprep.subr.bf16.mxu0 0
  %468 = vmatpush1.bf16.msra.mxu0 0
  %469 = vmatprep.subr.bf16.mxu0 0
  %470 = vmatpush1.bf16.msra.mxu0 0
  %471 = vmatprep.subr.bf16.mxu0 %v240
  %472 = vmatpush1.bf16.msra.mxu0 %v237
  %473 = vmatprep.subr.bf16.mxu0 %v161
  %474 = vmatpush1.bf16.msra.mxu0 %v160
  %475 = vmatprep.subr.bf16.mxu0 0
  %476 = vmatpush2.bf16.msra.mxu0 0
  %477 = vmatprep.subr.bf16.mxu0 0
  %478 = vmatpush2.bf16.msra.mxu0 0
  %479 = vmatprep.subr.bf16.mxu0 0
  %480 = vmatpush2.bf16.msra.mxu0 0
  %481 = vmatprep.subr.bf16.mxu0 0
  %482 = vmatpush2.bf16.msra.mxu0 0
  %483 = vmatprep.subr.bf16.mxu0 0
  %484 = vmatpush2.bf16.msra.mxu0 0
  %485 = vmatprep.subr.bf16.mxu0 0
  %486 = vmatpush2.bf16.msra.mxu0 0
  %487 = vmatprep.subr.bf16.mxu0 0
  %488 = vmatpush2.bf16.msra.mxu0 0
  %489 = vmatprep.subr.bf16.mxu0 0
  %490 = vmatpush2.bf16.msra.mxu0 0
  %491 = vmatprep.mubr.bf16.mxu0 0
  %492 = vmatmul.mubr.bf16.gmra.mxu0 %v200
  %v493 = vpop.f32.mrf.mxu0
  %v494 = vadd.f32 %v52, %v493
  %v495 = vpop.f32.mrf.mxu0
  %v496 = vadd.f32 %v52, %v495
  %v497 = vpop.f32.mrf.mxu0
  %v498 = vpop.f32.mrf.mxu0
  %499 = vdwg.mxu0
  %500 = vmatprep.subr.bf16.mxu0 0
  %501 = vmatpush1.bf16.msra.mxu0 0
  %502 = vmatprep.subr.bf16.mxu0 0
  %503 = vmatpush1.bf16.msra.mxu0 0
  %504 = vmatprep.subr.bf16.mxu0 0
  %505 = vmatpush1.bf16.msra.mxu0 0
  %506 = vmatprep.subr.bf16.mxu0 0
  %507 = vmatpush1.bf16.msra.mxu0 0
  %508 = vmatprep.subr.bf16.mxu0 0
  %509 = vmatpush1.bf16.msra.mxu0 0
  %510 = vmatprep.subr.bf16.mxu0 0
  %511 = vmatpush1.bf16.msra.mxu0 0
  %512 = vmatprep.subr.bf16.mxu0 %v246
  %513 = vmatpush1.bf16.msra.mxu0 %v243
  %514 = vmatprep.subr.bf16.mxu0 %v163
  %515 = vmatpush1.bf16.msra.mxu0 %v162
  %516 = vmatprep.subr.bf16.mxu0 0
  %517 = vmatpush2.bf16.msra.mxu0 0
  %518 = vmatprep.subr.bf16.mxu0 0
  %519 = vmatpush2.bf16.msra.mxu0 0
  %520 = vmatprep.subr.bf16.mxu0 0
  %521 = vmatpush2.bf16.msra.mxu0 0
  %522 = vmatprep.subr.bf16.mxu0 0
  %523 = vmatpush2.bf16.msra.mxu0 0
  %524 = vmatprep.subr.bf16.mxu0 0
  %525 = vmatpush2.bf16.msra.mxu0 0
  %526 = vmatprep.subr.bf16.mxu0 0
  %527 = vmatpush2.bf16.msra.mxu0 0
  %528 = vmatprep.subr.bf16.mxu0 0
  %529 = vmatpush2.bf16.msra.mxu0 0
  %530 = vmatprep.subr.bf16.mxu0 0
  %531 = vmatpush2.bf16.msra.mxu0 0
  %532 = vmatprep.mubr.bf16.mxu0 0
  %533 = vmatmul.mubr.bf16.gmra.mxu0 %v200
  %v534 = vpop.f32.mrf.mxu0
  %v535 = vadd.f32 %v52, %v534
  %v536 = vpop.f32.mrf.mxu0
  %v537 = vadd.f32 %v52, %v536
  %v538 = vpop.f32.mrf.mxu0
  %v539 = vpop.f32.mrf.mxu0
  %540 = vdwg.mxu0
  %541 = vmatprep.subr.bf16.mxu0 0
  %542 = vmatpush1.bf16.msra.mxu0 0
  %543 = vmatprep.subr.bf16.mxu0 0
  %544 = vmatpush1.bf16.msra.mxu0 0
  %545 = vmatprep.subr.bf16.mxu0 0
  %546 = vmatpush1.bf16.msra.mxu0 0
  %547 = vmatprep.subr.bf16.mxu0 0
  %548 = vmatpush1.bf16.msra.mxu0 0
  %549 = vmatprep.subr.bf16.mxu0 0
  %550 = vmatpush1.bf16.msra.mxu0 0
  %551 = vmatprep.subr.bf16.mxu0 0
  %552 = vmatpush1.bf16.msra.mxu0 0
  %553 = vmatprep.subr.bf16.mxu0 %v252
  %554 = vmatpush1.bf16.msra.mxu0 %v249
  %555 = vmatprep.subr.bf16.mxu0 %v165
  %556 = vmatpush1.bf16.msra.mxu0 %v164
  %557 = vmatprep.subr.bf16.mxu0 0
  %558 = vmatpush2.bf16.msra.mxu0 0
  %559 = vmatprep.subr.bf16.mxu0 0
  %560 = vmatpush2.bf16.msra.mxu0 0
  %561 = vmatprep.subr.bf16.mxu0 0
  %562 = vmatpush2.bf16.msra.mxu0 0
  %563 = vmatprep.subr.bf16.mxu0 0
  %564 = vmatpush2.bf16.msra.mxu0 0
  %565 = vmatprep.subr.bf16.mxu0 0
  %566 = vmatpush2.bf16.msra.mxu0 0
  %567 = vmatprep.subr.bf16.mxu0 0
  %568 = vmatpush2.bf16.msra.mxu0 0
  %569 = vmatprep.subr.bf16.mxu0 0
  %570 = vmatpush2.bf16.msra.mxu0 0
  %571 = vmatprep.subr.bf16.mxu0 0
  %572 = vmatpush2.bf16.msra.mxu0 0
  %573 = vmatprep.mubr.bf16.mxu0 0
  %574 = vmatmul.mubr.bf16.gmra.mxu0 %v200
  %v575 = vpop.f32.mrf.mxu0
  %v576 = vadd.f32 %v52, %v575
  %v577 = vpop.f32.mrf.mxu0
  %v578 = vadd.f32 %v52, %v577
  %v579 = vpop.f32.mrf.mxu0
  %v580 = vpop.f32.mrf.mxu0
  %581 = vdwg.mxu0
  %v582 = vmax.f32 %v289, 0.0
  %v583 = vmax.f32 %v291, 0.0
  %v584 = vmax.f32 %v330, 0.0
  %v585 = vmax.f32 %v332, 0.0
  %v586 = vmax.f32 %v371, 0.0
  %v587 = vmax.f32 %v373, 0.0
  %v588 = vmax.f32 %v412, 0.0
  %v589 = vmax.f32 %v414, 0.0
  %v590 = vmax.f32 %v453, 0.0
  %v591 = vmax.f32 %v455, 0.0
  %v592 = vmax.f32 %v494, 0.0
  %v593 = vmax.f32 %v496, 0.0
  %v594 = vmax.f32 %v535, 0.0
  %v595 = vmax.f32 %v537, 0.0
  %v596 = vmax.f32 %v576, 0.0
  %v597 = vmax.f32 %v578, 0.0
  %v598 = vpack.c.bf16 %v582, %v582
  %v599 = vpack.c.bf16 %v583, %v583
  %v600 = vpack.c.bf16 %v584, %v584
  %v601 = vpack.c.bf16 %v585, %v585
  %v602 = vpack.c.bf16 %v586, %v586
  %v603 = vpack.c.bf16 %v587, %v587
  %v604 = vpack.c.bf16 %v588, %v588
  %v605 = vpack.c.bf16 %v589, %v589
  %v606 = vpack.c.bf16 %v590, %v590
  %v607 = vpack.c.bf16 %v591, %v591
  %v608 = vpack.c.bf16 %v592, %v592
  %v609 = vpack.c.bf16 %v593, %v593
  %v610 = vpack.c.bf16 %v594, %v594
  %v611 = vpack.c.bf16 %v595, %v595
  %v612 = vpack.c.bf16 %v596, %v596
  %v613 = vpack.c.bf16 %v597, %v597
  %v630 = vunpack.c.l.b16 %v598
  %v631 = vunpack.c.l.b16 %v599
  %v632 = vunpack.c.l.b16 %v600
  %v633 = vunpack.c.l.b16 %v601
  %v634 = vunpack.c.l.b16 %v602
  %v635 = vunpack.c.l.b16 %v603
  %v636 = vunpack.c.l.b16 %v604
  %v637 = vunpack.c.l.b16 %v605
  %v638 = vunpack.c.l.b16 %v606
  %v639 = vunpack.c.l.b16 %v607
  %v640 = vunpack.c.l.b16 %v608
  %v641 = vunpack.c.l.b16 %v609
  %v642 = vunpack.c.l.b16 %v610
  %v643 = vunpack.c.l.b16 %v611
  %v644 = vunpack.c.l.b16 %v612
  %v645 = vunpack.c.l.b16 %v613
  %v646 = vpack.c.b16 %v631, %v630
  %v647 = vpack.c.b16 %v633, %v632
  %v648 = vpack.c.b16 %v635, %v634
  %v649 = vpack.c.b16 %v637, %v636
  %v650 = vpack.c.b16 %v639, %v638
  %v651 = vpack.c.b16 %v641, %v640
  %v652 = vpack.c.b16 %v643, %v642
  %v653 = vpack.c.b16 %v645, %v644
  %662 = vst [vmem:[%s3] sm:$0x77] %v646
  %663 = vst [vmem:[%s3 + $0x8] sm:$0x77] %v647
  %664 = vst [vmem:[%s3 + $0x10] sm:$0x77] %v648
  %665 = vst [vmem:[%s3 + $0x18] sm:$0x77] %v649
  %666 = vst [vmem:[%s3 + $0x20] sm:$0x77] %v650
  %667 = vst [vmem:[%s3 + $0x28] sm:$0x77] %v651
  %668 = vst [vmem:[%s3 + $0x30] sm:$0x77] %v652
  %669 = vst [vmem:[%s3 + $0x38] sm:$0x77] %v653
  // Predicated region
  $region14: #{animal_baseline_forward.4} parent=0 // pred_check
    _
  $region15: #{animal_baseline_forward.4} parent=0 // pred_check_branch
    %671 = sbr.rel (0) target = $region17
  $region16: #{animal_baseline_forward.4} parent=0 // pred_region
    _
  $region17: #{animal_baseline_forward.4} parent=0 // pred_fallthru
    _
  // Predicated region
  $region18: #{animal_baseline_forward.4} parent=0 // pred_check
    _
  $region19: #{animal_baseline_forward.4} parent=0 // pred_check_branch
    %673 = sbr.rel (0) target = $region21
  $region20: #{animal_baseline_forward.4} parent=0 // pred_region
    _
  $region21: #{animal_baseline_forward.4} parent=0 // pred_fallthru
    _

// kernel: animal_baseline_forward.5
$region0: #{animal_baseline_forward.5}
  #allocation0 [shape = 'u32[]', space=smem, size = 0x4, offset = 0x4, fixed_abs, tag = 'smem constant byte address 0x4 - core index']
  #allocation1 [shape = 'u32[144,128]{1,0:T(1,128)}', space=vmem, size = 0x12000, scoped, tag = 'internal scratch']
  %s0 = inlined_call_operand.vmem [shape: bf16[12,54], index: 0, kind: input, shape index: {}]
  %s1 = inlined_call_operand.vmem [shape: f32[12,1], index: 1, kind: input, shape index: {}]
  %s2 = inlined_call_operand.vmem [shape: bf16[54,512], index: 2, kind: input, shape index: {}]
  %s3 = inlined_call_operand.vmem [shape: bf16[12,512], index: 3, kind: output, shape index: {}]
  %s4 = sld [smem:[#allocation0]]
  $region22: #{animal_baseline_forward.5} parent=0
    _
  %s6 = ssub.s32 1, %s4
  %s7 = scalar_select 0, %s6, %s4
  // Predicated region
  $region2: #{animal_baseline_forward.5} parent=0 // pred_check
    _
  $region3: #{animal_baseline_forward.5} parent=0 // pred_check_branch
    %9 = sbr.rel (0) target = $region5
  $region4: #{animal_baseline_forward.5} parent=0 // pred_region
    _
  $region5: #{animal_baseline_forward.5} parent=0 // pred_fallthru
    _
  // Predicated region
  $region6: #{animal_baseline_forward.5} parent=0 // pred_check
    _
  $region7: #{animal_baseline_forward.5} parent=0 // pred_check_branch
    %11 = sbr.rel (0) target = $region9
  $region8: #{animal_baseline_forward.5} parent=0 // pred_region
    _
  $region9: #{animal_baseline_forward.5} parent=0 // pred_fallthru
    _
  // Predicated region
  $region10: #{animal_baseline_forward.5} parent=0 // pred_check
    _
  $region11: #{animal_baseline_forward.5} parent=0 // pred_check_branch
    %13 = sbr.rel (0) target = $region13
  $region12: #{animal_baseline_forward.5} parent=0 // pred_region
    _
  $region13: #{animal_baseline_forward.5} parent=0 // pred_fallthru
    _
  %v15 = vld [vmem:[%s0] sm:$0xf]
  %v16 = vld [vmem:[%s0 + $0x4] sm:$0x3]
  %v17 = vld [vmem:[%s2] sm:$0xff]
  %v18 = vld [vmem:[%s2 + $0x8] sm:$0xff]
  %v19 = vld [vmem:[%s2 + $0x10] sm:$0xff]
  %v20 = vld [vmem:[%s2 + $0x18] sm:$0xff]
  %v21 = vld [vmem:[%s2 + $0x20] sm:$0xff]
  %v22 = vld [vmem:[%s2 + $0x28] sm:$0xff]
  %v23 = vld [vmem:[%s2 + $0x30] sm:$0xff]
  %v24 = vld [vmem:[%s2 + $0x38] sm:$0xff]
  %v25 = vld [vmem:[%s2 + $0x40] sm:$0xff]
  %v26 = vld [vmem:[%s2 + $0x48] sm:$0xff]
  %v27 = vld [vmem:[%s2 + $0x50] sm:$0xff]
  %v28 = vld [vmem:[%s2 + $0x58] sm:$0xff]
  %v29 = vld [vmem:[%s2 + $0x60] sm:$0x77]
  %v30 = vld [vmem:[%s2 + $0x68] sm:$0x77]
  %v31 = vld [vmem:[%s1] sm:$0xff]
  %v32 = vld [vmem:[%s1 + $0x8] sm:$0xf]
  %34 = vset.pattern.permute.xlu0 0
  %35 = vperm.xlu0 %34, %v31
  %v36 = vpop.permute.xlu0 %35
  %39 = vset.pattern.permute.xlu0 0
  %40 = vperm.xlu0 %39, %v32
  %v41 = vpop.permute.xlu0 %40
  %v45 = vunpack.c.l.b16 %v15
  %v46 = vunpack.c.l.b16 %v16
  %v47 = vpack.c.b16 %v46, %v45
  %v62 = vunpack.c.l.b16 %v17
  %v63 = vunpack.c.h.b16 %v17
  %v64 = vunpack.c.l.b16 %v18
  %v65 = vunpack.c.h.b16 %v18
  %v66 = vunpack.c.l.b16 %v19
  %v67 = vunpack.c.h.b16 %v19
  %v68 = vunpack.c.l.b16 %v20
  %v69 = vunpack.c.h.b16 %v20
  %v70 = vunpack.c.l.b16 %v21
  %v71 = vunpack.c.h.b16 %v21
  %v72 = vunpack.c.l.b16 %v22
  %v73 = vunpack.c.h.b16 %v22
  %v74 = vunpack.c.l.b16 %v23
  %v75 = vunpack.c.h.b16 %v23
  %v76 = vunpack.c.l.b16 %v24
  %v77 = vunpack.c.h.b16 %v24
  %v78 = vunpack.c.l.b16 %v25
  %v79 = vunpack.c.h.b16 %v25
  %v80 = vunpack.c.l.b16 %v26
  %v81 = vunpack.c.h.b16 %v26
  %v82 = vunpack.c.l.b16 %v27
  %v83 = vunpack.c.h.b16 %v27
  %v84 = vunpack.c.l.b16 %v28
  %v85 = vunpack.c.h.b16 %v28
  %v86 = vunpack.c.l.b16 %v29
  %v87 = vunpack.c.h.b16 %v29
  %v88 = vunpack.c.l.b16 %v30
  %v89 = vunpack.c.h.b16 %v30
  %v90 = vpack.c.b16 %v66, %v62
  %v91 = vpack.c.b16 %v67, %v63
  %v92 = vpack.c.b16 %v68, %v64
  %v93 = vpack.c.b16 %v69, %v65
  %v94 = vpack.c.b16 %v74, %v70
  %v95 = vpack.c.b16 %v75, %v71
  %v96 = vpack.c.b16 %v76, %v72
  %v97 = vpack.c.b16 %v77, %v73
  %v98 = vpack.c.b16 %v82, %v78
  %v99 = vpack.c.b16 %v83, %v79
  %v100 = vpack.c.b16 %v84, %v80
  %v101 = vpack.c.b16 %v85, %v81
  %v102 = vpack.c.b16 %v86, %v86
  %v103 = vpack.c.b16 %v87, %v87
  %v104 = vpack.c.b16 %v88, %v88
  %v105 = vpack.c.b16 %v89, %v89
  %vm118 = vcmask 441344
  %v120 = vsel %vm118, %v47, 0
  %vm122 = vcmask 1042432
  %v124 = vsel %vm122, %v102, 0
  %v127 = vsel %vm122, %v103, 0
  %v130 = vsel %vm122, %v104, 0
  %v133 = vsel %vm122, %v105, 0
  %135 = vmatprep.subr.bf16.mxu0 0
  %136 = vmatpush1.bf16.msra.mxu0 0
  %137 = vmatprep.subr.bf16.mxu0 0
  %138 = vmatpush1.bf16.msra.mxu0 0
  %139 = vmatprep.subr.bf16.mxu0 0
  %140 = vmatpush1.bf16.msra.mxu0 0
  %141 = vmatprep.subr.bf16.mxu0 0
  %142 = vmatpush1.bf16.msra.mxu0 0
  %143 = vmatprep.subr.bf16.mxu0 %v127
  %144 = vmatpush1.bf16.msra.mxu0 %v124
  %145 = vmatprep.subr.bf16.mxu0 %v99
  %146 = vmatpush1.bf16.msra.mxu0 %v98
  %147 = vmatprep.subr.bf16.mxu0 %v95
  %148 = vmatpush1.bf16.msra.mxu0 %v94
  %149 = vmatprep.subr.bf16.mxu0 %v91
  %150 = vmatpush1.bf16.msra.mxu0 %v90
  %151 = vmatprep.subr.bf16.mxu0 0
  %152 = vmatpush2.bf16.msra.mxu0 0
  %153 = vmatprep.subr.bf16.mxu0 0
  %154 = vmatpush2.bf16.msra.mxu0 0
  %155 = vmatprep.subr.bf16.mxu0 0
  %156 = vmatpush2.bf16.msra.mxu0 0
  %157 = vmatprep.subr.bf16.mxu0 0
  %158 = vmatpush2.bf16.msra.mxu0 0
  %159 = vmatprep.subr.bf16.mxu0 0
  %160 = vmatpush2.bf16.msra.mxu0 0
  %161 = vmatprep.subr.bf16.mxu0 0
  %162 = vmatpush2.bf16.msra.mxu0 0
  %163 = vmatprep.subr.bf16.mxu0 0
  %164 = vmatpush2.bf16.msra.mxu0 0
  %165 = vmatprep.subr.bf16.mxu0 0
  %166 = vmatpush2.bf16.msra.mxu0 0
  %167 = vmatprep.mubr.bf16.mxu0 0
  %168 = vmatmul.mubr.bf16.gmra.mxu0 %v120
  %v169 = vpop.f32.mrf.mxu0
  %v170 = vadd.f32 %v36, %v169
  %v171 = vpop.f32.mrf.mxu0
  %v172 = vadd.f32 %v36, %v171
  %v173 = vpop.f32.mrf.mxu0
  %v174 = vadd.f32 %v41, %v173
  %v175 = vpop.f32.mrf.mxu0
  %v176 = vadd.f32 %v41, %v175
  %177 = vdwg.mxu0
  %178 = vmatprep.subr.bf16.mxu0 0
  %179 = vmatpush1.bf16.msra.mxu0 0
  %180 = vmatprep.subr.bf16.mxu0 0
  %181 = vmatpush1.bf16.msra.mxu0 0
  %182 = vmatprep.subr.bf16.mxu0 0
  %183 = vmatpush1.bf16.msra.mxu0 0
  %184 = vmatprep.subr.bf16.mxu0 0
  %185 = vmatpush1.bf16.msra.mxu0 0
  %186 = vmatprep.subr.bf16.mxu0 %v133
  %187 = vmatpush1.bf16.msra.mxu0 %v130
  %188 = vmatprep.subr.bf16.mxu0 %v101
  %189 = vmatpush1.bf16.msra.mxu0 %v100
  %190 = vmatprep.subr.bf16.mxu0 %v97
  %191 = vmatpush1.bf16.msra.mxu0 %v96
  %192 = vmatprep.subr.bf16.mxu0 %v93
  %193 = vmatpush1.bf16.msra.mxu0 %v92
  %194 = vmatprep.subr.bf16.mxu0 0
  %195 = vmatpush2.bf16.msra.mxu0 0
  %196 = vmatprep.subr.bf16.mxu0 0
  %197 = vmatpush2.bf16.msra.mxu0 0
  %198 = vmatprep.subr.bf16.mxu0 0
  %199 = vmatpush2.bf16.msra.mxu0 0
  %200 = vmatprep.subr.bf16.mxu0 0
  %201 = vmatpush2.bf16.msra.mxu0 0
  %202 = vmatprep.subr.bf16.mxu0 0
  %203 = vmatpush2.bf16.msra.mxu0 0
  %204 = vmatprep.subr.bf16.mxu0 0
  %205 = vmatpush2.bf16.msra.mxu0 0
  %206 = vmatprep.subr.bf16.mxu0 0
  %207 = vmatpush2.bf16.msra.mxu0 0
  %208 = vmatprep.subr.bf16.mxu0 0
  %209 = vmatpush2.bf16.msra.mxu0 0
  %210 = vmatprep.mubr.bf16.mxu0 0
  %211 = vmatmul.mubr.bf16.gmra.mxu0 %v120
  %v212 = vpop.f32.mrf.mxu0
  %v213 = vadd.f32 %v36, %v212
  %v214 = vpop.f32.mrf.mxu0
  %v215 = vadd.f32 %v36, %v214
  %v216 = vpop.f32.mrf.mxu0
  %v217 = vadd.f32 %v41, %v216
  %v218 = vpop.f32.mrf.mxu0
  %v219 = vadd.f32 %v41, %v218
  %220 = vdwg.mxu0
  %v221 = vmax.f32 %v170, 0.0
  %v222 = vmax.f32 %v172, 0.0
  %v223 = vmax.f32 %v213, 0.0
  %v224 = vmax.f32 %v215, 0.0
  %v225 = vmax.f32 %v174, 0.0
  %v226 = vmax.f32 %v176, 0.0
  %v227 = vmax.f32 %v217, 0.0
  %v228 = vmax.f32 %v219, 0.0
  %v229 = vpack.c.bf16 %v225, %v221
  %v230 = vpack.c.bf16 %v226, %v222
  %v231 = vpack.c.bf16 %v227, %v223
  %v232 = vpack.c.bf16 %v228, %v224
  %v237 = vunpack.c.l.b16 %v229
  %v238 = vunpack.c.l.b16 %v230
  %v239 = vunpack.c.l.b16 %v231
  %v240 = vunpack.c.l.b16 %v232
  %v241 = vunpack.c.h.b16 %v229
  %v242 = vunpack.c.h.b16 %v230
  %v243 = vunpack.c.h.b16 %v231
  %v244 = vunpack.c.h.b16 %v232
  %v245 = vpack.c.b16 %v238, %v237
  %v246 = vpack.c.b16 %v240, %v239
  %v247 = vpack.c.b16 %v242, %v241
  %v248 = vpack.c.b16 %v244, %v243
  %253 = vst [vmem:[%s3] sm:$0xff] %v245
  %254 = vst [vmem:[%s3 + $0x8] sm:$0xff] %v246
  %255 = vst [vmem:[%s3 + $0x10] sm:$0x33] %v247
  %256 = vst [vmem:[%s3 + $0x18] sm:$0x33] %v248
  // Predicated region
  $region14: #{animal_baseline_forward.5} parent=0 // pred_check
    _
  $region15: #{animal_baseline_forward.5} parent=0 // pred_check_branch
    %258 = sbr.rel (0) target = $region17
  $region16: #{animal_baseline_forward.5} parent=0 // pred_region
    _
  $region17: #{animal_baseline_forward.5} parent=0 // pred_fallthru
    _
  // Predicated region
  $region18: #{animal_baseline_forward.5} parent=0 // pred_check
    _
  $region19: #{animal_baseline_forward.5} parent=0 // pred_check_branch
    %260 = sbr.rel (0) target = $region21
  $region20: #{animal_baseline_forward.5} parent=0 // pred_region
    _
  $region21: #{animal_baseline_forward.5} parent=0 // pred_fallthru
    _

// kernel: animal_baseline_forward.6
$region0: #{animal_baseline_forward.6}
  #allocation0 [shape = 'u32[]', space=smem, size = 0x4, offset = 0x4, fixed_abs, tag = 'smem constant byte address 0x4 - core index']
  #allocation1 [shape = 'u32[144,128]{1,0:T(1,128)}', space=vmem, size = 0x12000, scoped, tag = 'internal scratch']
  %s0 = inlined_call_operand.vmem [shape: bf16[24,108], index: 0, kind: input, shape index: {}]
  %s1 = inlined_call_operand.vmem [shape: f32[24,1], index: 1, kind: input, shape index: {}]
  %s2 = inlined_call_operand.vmem [shape: bf16[108,128], index: 2, kind: input, shape index: {}]
  %s3 = inlined_call_operand.vmem [shape: bf16[24,128], index: 3, kind: output, shape index: {}]
  %s4 = sld [smem:[#allocation0]]
  $region22: #{animal_baseline_forward.6} parent=0
    _
  %s6 = ssub.s32 1, %s4
  %s7 = scalar_select 0, %s6, %s4
  // Predicated region
  $region2: #{animal_baseline_forward.6} parent=0 // pred_check
    _
  $region3: #{animal_baseline_forward.6} parent=0 // pred_check_branch
    %9 = sbr.rel (0) target = $region5
  $region4: #{animal_baseline_forward.6} parent=0 // pred_region
    _
  $region5: #{animal_baseline_forward.6} parent=0 // pred_fallthru
    _
  // Predicated region
  $region6: #{animal_baseline_forward.6} parent=0 // pred_check
    _
  $region7: #{animal_baseline_forward.6} parent=0 // pred_check_branch
    %11 = sbr.rel (0) target = $region9
  $region8: #{animal_baseline_forward.6} parent=0 // pred_region
    _
  $region9: #{animal_baseline_forward.6} parent=0 // pred_fallthru
    _
  // Predicated region
  $region10: #{animal_baseline_forward.6} parent=0 // pred_check
    _
  $region11: #{animal_baseline_forward.6} parent=0 // pred_check_branch
    %13 = sbr.rel (0) target = $region13
  $region12: #{animal_baseline_forward.6} parent=0 // pred_region
    _
  $region13: #{animal_baseline_forward.6} parent=0 // pred_fallthru
    _
  %v15 = vld [vmem:[%s0] sm:$0xf]
  %v16 = vld [vmem:[%s0 + $0x4] sm:$0xf]
  %v17 = vld [vmem:[%s0 + $0x8] sm:$0xf]
  %v18 = vld [vmem:[%s2] sm:$0xf]
  %v19 = vld [vmem:[%s2 + $0x4] sm:$0xf]
  %v20 = vld [vmem:[%s2 + $0x8] sm:$0xf]
  %v21 = vld [vmem:[%s2 + $0xc] sm:$0xf]
  %v22 = vld [vmem:[%s2 + $0x10] sm:$0xf]
  %v23 = vld [vmem:[%s2 + $0x14] sm:$0xf]
  %v24 = vld [vmem:[%s2 + $0x18] sm:$0xf]
  %v25 = vld [vmem:[%s2 + $0x1c] sm:$0xf]
  %v26 = vld [vmem:[%s2 + $0x20] sm:$0xf]
  %v27 = vld [vmem:[%s2 + $0x24] sm:$0xf]
  %v28 = vld [vmem:[%s2 + $0x28] sm:$0xf]
  %v29 = vld [vmem:[%s2 + $0x2c] sm:$0xf]
  %v30 = vld [vmem:[%s2 + $0x30] sm:$0xf]
  %v31 = vld [vmem:[%s2 + $0x34] sm:$0x3]
  %v32 = vld [vmem:[%s1] sm:$0xff]
  %v33 = vld [vmem:[%s1 + $0x8] sm:$0xff]
  %v34 = vld [vmem:[%s1 + $0x10] sm:$0xff]
  %36 = vset.pattern.permute.xlu0 0
  %37 = vperm.xlu0 %36, %v32
  %v38 = vpop.permute.xlu0 %37
  %41 = vset.pattern.permute.xlu0 0
  %42 = vperm.xlu0 %41, %v33
  %v43 = vpop.permute.xlu0 %42
  %46 = vset.pattern.permute.xlu0 0
  %47 = vperm.xlu0 %46, %v34
  %v48 = vpop.permute.xlu0 %47
  %v53 = vunpack.c.l.b16 %v15
  %v54 = vunpack.c.l.b16 %v16
  %v55 = vunpack.c.l.b16 %v17
  %v56 = vpack.c.b16 %v54, %v53
  %v57 = vpack.c.b16 %v55, %v55
  %v72 = vunpack.c.l.b16 %v18
  %v73 = vunpack.c.l.b16 %v19
  %v74 = vunpack.c.l.b16 %v20
  %v75 = vunpack.c.l.b16 %v21
  %v76 = vunpack.c.l.b16 %v22
  %v77 = vunpack.c.l.b16 %v23
  %v78 = vunpack.c.l.b16 %v24
  %v79 = vunpack.c.l.b16 %v25
  %v80 = vunpack.c.l.b16 %v26
  %v81 = vunpack.c.l.b16 %v27
  %v82 = vunpack.c.l.b16 %v28
  %v83 = vunpack.c.l.b16 %v29
  %v84 = vunpack.c.l.b16 %v30
  %v85 = vunpack.c.l.b16 %v31
  %v86 = vpack.c.b16 %v73, %v72
  %v87 = vpack.c.b16 %v75, %v74
  %v88 = vpack.c.b16 %v77, %v76
  %v89 = vpack.c.b16 %v79, %v78
  %v90 = vpack.c.b16 %v81, %v80
  %v91 = vpack.c.b16 %v83, %v82
  %v92 = vpack.c.b16 %v85, %v84
  %vm99 = vcmask 883712
  %v101 = vsel %vm99, %v56, 0
  %v104 = vsel %vm99, %v57, 0
  %vm106 = vcmask 1045504
  %v108 = vsel %vm106, %v92, 0
  %110 = vmatprep.subr.bf16.mxu0 0
  %111 = vmatpush1.bf16.msra.mxu0 0
  %112 = vmatprep.subr.bf16.mxu0 0
  %113 = vmatpush1.bf16.msra.mxu0 %v108
  %114 = vmatprep.subr.bf16.mxu0 0
  %115 = vmatpush1.bf16.msra.mxu0 %v91
  %116 = vmatprep.subr.bf16.mxu0 0
  %117 = vmatpush1.bf16.msra.mxu0 %v90
  %118 = vmatprep.subr.bf16.mxu0 0
  %119 = vmatpush1.bf16.msra.mxu0 %v89
  %120 = vmatprep.subr.bf16.mxu0 0
  %121 = vmatpush1.bf16.msra.mxu0 %v88
  %122 = vmatprep.subr.bf16.mxu0 0
  %123 = vmatpush1.bf16.msra.mxu0 %v87
  %124 = vmatprep.subr.bf16.mxu0 0
  %125 = vmatpush1.bf16.msra.mxu0 %v86
  %126 = vmatprep.subr.bf16.mxu0 0
  %127 = vmatpush2.bf16.msra.mxu0 0
  %128 = vmatprep.subr.bf16.mxu0 0
  %129 = vmatpush2.bf16.msra.mxu0 0
  %130 = vmatprep.subr.bf16.mxu0 0
  %131 = vmatpush2.bf16.msra.mxu0 0
  %132 = vmatprep.subr.bf16.mxu0 0
  %133 = vmatpush2.bf16.msra.mxu0 0
  %134 = vmatprep.subr.bf16.mxu0 0
  %135 = vmatpush2.bf16.msra.mxu0 0
  %136 = vmatprep.subr.bf16.mxu0 0
  %137 = vmatpush2.bf16.msra.mxu0 0
  %138 = vmatprep.subr.bf16.mxu0 0
  %139 = vmatpush2.bf16.msra.mxu0 0
  %140 = vmatprep.subr.bf16.mxu0 0
  %141 = vmatpush2.bf16.msra.mxu0 0
  %142 = vmatprep.mubr.bf16.mxu0 0
  %143 = vmatmul.mubr.bf16.gmra.mxu0 %v101
  %v144 = vpop.f32.mrf.mxu0
  %v145 = vadd.f32 %v38, %v144
  %v146 = vpop.f32.mrf.mxu0
  %v147 = vpop.f32.mrf.mxu0
  %v148 = vadd.f32 %v43, %v147
  %v149 = vpop.f32.mrf.mxu0
  %150 = vmatprep.mubr.bf16.mxu0 0
  %151 = vmatmul.mubr.bf16.gmra.mxu0 %v104
  %v152 = vpop.f32.mrf.mxu0
  %v153 = vadd.f32 %v48, %v152
  %v154 = vpop.f32.mrf.mxu0
  %v155 = vpop.f32.mrf.mxu0
  %v156 = vpop.f32.mrf.mxu0
  %157 = vdwg.mxu0
  %v158 = vmax.f32 %v145, 0.0
  %v159 = vmax.f32 %v148, 0.0
  %v160 = vmax.f32 %v153, 0.0
  %v161 = vpack.c.bf16 %v159, %v158
  %v162 = vpack.c.bf16 %v160, %v160
  %v165 = vunpack.c.l.b16 %v161
  %v166 = vunpack.c.h.b16 %v161
  %v167 = vunpack.c.l.b16 %v162
  %v168 = vpack.c.b16 %v165, %v165
  %v169 = vpack.c.b16 %v166, %v166
  %v170 = vpack.c.b16 %v167, %v167
  %174 = vst [vmem:[%s3] sm:$0xf] %v168
  %175 = vst [vmem:[%s3 + $0x4] sm:$0xf] %v169
  %176 = vst [vmem:[%s3 + $0x8] sm:$0xf] %v170
  // Predicated region
  $region14: #{animal_baseline_forward.6} parent=0 // pred_check
    _
  $region15: #{animal_baseline_forward.6} parent=0 // pred_check_branch
    %178 = sbr.rel (0) target = $region17
  $region16: #{animal_baseline_forward.6} parent=0 // pred_region
    _
  $region17: #{animal_baseline_forward.6} parent=0 // pred_fallthru
    _
  // Predicated region
  $region18: #{animal_baseline_forward.6} parent=0 // pred_check
    _
  $region19: #{animal_baseline_forward.6} parent=0 // pred_check_branch
    %180 = sbr.rel (0) target = $region21
  $region20: #{animal_baseline_forward.6} parent=0 // pred_region
    _
  $region21: #{animal_baseline_forward.6} parent=0 // pred_fallthru
    _

// kernel: animal_baseline_forward.7
$region0: #{animal_baseline_forward.7}
  #allocation0 [shape = 'u32[]', space=smem, size = 0x4, offset = 0x4, fixed_abs, tag = 'smem constant byte address 0x4 - core index']
  #allocation1 [shape = 'u32[144,128]{1,0:T(1,128)}', space=vmem, size = 0x12000, scoped, tag = 'internal scratch']
  %s0 = inlined_call_operand.vmem [shape: bf16[2,1536], index: 0, kind: input, shape index: {}]
  %s1 = inlined_call_operand.vmem [shape: bf16[1536,128], index: 1, kind: input, shape index: {}]
  %s2 = inlined_call_operand.vmem [shape: f32[1,128], index: 2, kind: input, shape index: {}]
  %s3 = inlined_call_operand.vmem [shape: bf16[128,16], index: 3, kind: input, shape index: {}]
  %s4 = inlined_call_operand.vmem [shape: f32[1,16], index: 4, kind: input, shape index: {}]
  %s5 = inlined_call_operand.hbm [shape: f32[2,16], index: 5, kind: output, shape index: {}]
  %s6 = sld [smem:[#allocation0]]
  $region30: #{animal_baseline_forward.7} parent=0
    _
  %s8 = ssub.s32 1, %s6
  %s9 = scalar_select 0, %s8, %s6
  $region1: #{animal_baseline_forward.7} parent=0
    #allocation2 [shape = 'u8[1024]{0}', space=vmem, size = 0x400, scoped, tag = 'output window, operand 0, single buffered']
    #allocation3 [shape = 's32[1]{0}', space=sflag, size = 0x4, scoped, tag = 'scoped memory for animal_baseline_forward.7']
    %10 = vsyncpa [#allocation3], 0
    // Predicated region
    $region2: #{animal_baseline_forward.7} parent=1 // pred_check
      _
    $region3: #{animal_baseline_forward.7} parent=1 // pred_check_branch
      %12 = sbr.rel (0) target = $region5
    $region4: #{animal_baseline_forward.7} parent=1 // pred_region
      _
    $region5: #{animal_baseline_forward.7} parent=1 // pred_fallthru
      _
    // Predicated region
    $region6: #{animal_baseline_forward.7} parent=1 // pred_check
      _
    $region7: #{animal_baseline_forward.7} parent=1 // pred_check_branch
      %14 = sbr.rel (0) target = $region9
    $region8: #{animal_baseline_forward.7} parent=1 // pred_region
      _
    $region9: #{animal_baseline_forward.7} parent=1 // pred_fallthru
      _
    // Predicated region
    $region10: #{animal_baseline_forward.7} parent=1 // pred_check
      _
    $region11: #{animal_baseline_forward.7} parent=1 // pred_check_branch
      %16 = sbr.rel (0) target = $region13
    $region12: #{animal_baseline_forward.7} parent=1 // pred_region
      _
    $region13: #{animal_baseline_forward.7} parent=1 // pred_fallthru
      _
    // Predicated region
    $region14: #{animal_baseline_forward.7} parent=1 // pred_check
      _
    $region15: #{animal_baseline_forward.7} parent=1 // pred_check_branch
      %18 = sbr.rel (0) target = $region17
    $region16: #{animal_baseline_forward.7} parent=1 // pred_region
      _
    $region17: #{animal_baseline_forward.7} parent=1 // pred_fallthru
      _
    // Predicated region
    $region18: #{animal_baseline_forward.7} parent=1 // pred_check
      _
    $region19: #{animal_baseline_forward.7} parent=1 // pred_check_branch
      %20 = sbr.rel (0) target = $region21
    $region20: #{animal_baseline_forward.7} parent=1 // pred_region
      _
    $region21: #{animal_baseline_forward.7} parent=1 // pred_fallthru
      _
    %v22 = vld [vmem:[%s0] sm:$0xff]
    %v23 = vld [vmem:[%s0 + $0x8] sm:$0xf]
    %v24 = vld [vmem:[%s1] sm:$0xf]
    %v25 = vld [vmem:[%s1 + $0x4] sm:$0xf]
    %v26 = vld [vmem:[%s1 + $0x8] sm:$0xf]
    %v27 = vld [vmem:[%s1 + $0xc] sm:$0xf]
    %v28 = vld [vmem:[%s1 + $0x10] sm:$0xf]
    %v29 = vld [vmem:[%s1 + $0x14] sm:$0xf]
    %v30 = vld [vmem:[%s1 + $0x18] sm:$0xf]
    %v31 = vld [vmem:[%s1 + $0x1c] sm:$0xf]
    %v32 = vld [vmem:[%s1 + $0x20] sm:$0xf]
    %v33 = vld [vmem:[%s1 + $0x24] sm:$0xf]
    %v34 = vld [vmem:[%s1 + $0x28] sm:$0xf]
    %v35 = vld [vmem:[%s1 + $0x2c] sm:$0xf]
    %v36 = vld [vmem:[%s1 + $0x30] sm:$0xf]
    %v37 = vld [vmem:[%s1 + $0x34] sm:$0xf]
    %v38 = vld [vmem:[%s1 + $0x38] sm:$0xf]
    %v39 = vld [vmem:[%s1 + $0x3c] sm:$0xf]
    %v40 = vld [vmem:[%s1 + $0x40] sm:$0xf]
    %v41 = vld [vmem:[%s1 + $0x44] sm:$0xf]
    %v42 = vld [vmem:[%s1 + $0x48] sm:$0xf]
    %v43 = vld [vmem:[%s1 + $0x4c] sm:$0xf]
    %v44 = vld [vmem:[%s1 + $0x50] sm:$0xf]
    %v45 = vld [vmem:[%s1 + $0x54] sm:$0xf]
    %v46 = vld [vmem:[%s1 + $0x58] sm:$0xf]
    %v47 = vld [vmem:[%s1 + $0x5c] sm:$0xf]
    %v48 = vld [vmem:[%s1 + $0x60] sm:$0xf]
    %v49 = vld [vmem:[%s1 + $0x64] sm:$0xf]
    %v50 = vld [vmem:[%s1 + $0x68] sm:$0xf]
    %v51 = vld [vmem:[%s1 + $0x6c] sm:$0xf]
    %v52 = vld [vmem:[%s1 + $0x70] sm:$0xf]
    %v53 = vld [vmem:[%s1 + $0x74] sm:$0xf]
    %v54 = vld [vmem:[%s1 + $0x78] sm:$0xf]
    %v55 = vld [vmem:[%s1 + $0x7c] sm:$0xf]
    %v56 = vld [vmem:[%s1 + $0x80] sm:$0xf]
    %v57 = vld [vmem:[%s1 + $0x84] sm:$0xf]
    %v58 = vld [vmem:[%s1 + $0x88] sm:$0xf]
    %v59 = vld [vmem:[%s1 + $0x8c] sm:$0xf]
    %v60 = vld [vmem:[%s1 + $0x90] sm:$0xf]
    %v61 = vld [vmem:[%s1 + $0x94] sm:$0xf]
    %v62 = vld [vmem:[%s1 + $0x98] sm:$0xf]
    %v63 = vld [vmem:[%s1 + $0x9c] sm:$0xf]
    %v64 = vld [vmem:[%s1 + $0xa0] sm:$0xf]
    %v65 = vld [vmem:[%s1 + $0xa4] sm:$0xf]
    %v66 = vld [vmem:[%s1 + $0xa8] sm:$0xf]
    %v67 = vld [vmem:[%s1 + $0xac] sm:$0xf]
    %v68 = vld [vmem:[%s1 + $0xb0] sm:$0xf]
    %v69 = vld [vmem:[%s1 + $0xb4] sm:$0xf]
    %v70 = vld [vmem:[%s1 + $0xb8] sm:$0xf]
    %v71 = vld [vmem:[%s1 + $0xbc] sm:$0xf]
    %v72 = vld [vmem:[%s1 + $0xc0] sm:$0xf]
    %v73 = vld [vmem:[%s1 + $0xc4] sm:$0xf]
    %v74 = vld [vmem:[%s1 + $0xc8] sm:$0xf]
    %v75 = vld [vmem:[%s1 + $0xcc] sm:$0xf]
    %v76 = vld [vmem:[%s1 + $0xd0] sm:$0xf]
    %v77 = vld [vmem:[%s1 + $0xd4] sm:$0xf]
    %v78 = vld [vmem:[%s1 + $0xd8] sm:$0xf]
    %v79 = vld [vmem:[%s1 + $0xdc] sm:$0xf]
    %v80 = vld [vmem:[%s1 + $0xe0] sm:$0xf]
    %v81 = vld [vmem:[%s1 + $0xe4] sm:$0xf]
    %v82 = vld [vmem:[%s1 + $0xe8] sm:$0xf]
    %v83 = vld [vmem:[%s1 + $0xec] sm:$0xf]
    %v84 = vld [vmem:[%s1 + $0xf0] sm:$0xf]
    %v85 = vld [vmem:[%s1 + $0xf4] sm:$0xf]
    %v86 = vld [vmem:[%s1 + $0xf8] sm:$0xf]
    %v87 = vld [vmem:[%s1 + $0xfc] sm:$0xf]
    %v88 = vld [vmem:[%s1 + $0x100] sm:$0xf]
    %v89 = vld [vmem:[%s1 + $0x104] sm:$0xf]
    %v90 = vld [vmem:[%s1 + $0x108] sm:$0xf]
    %v91 = vld [vmem:[%s1 + $0x10c] sm:$0xf]
    %v92 = vld [vmem:[%s1 + $0x110] sm:$0xf]
    %v93 = vld [vmem:[%s1 + $0x114] sm:$0xf]
    %v94 = vld [vmem:[%s1 + $0x118] sm:$0xf]
    %v95 = vld [vmem:[%s1 + $0x11c] sm:$0xf]
    %v96 = vld [vmem:[%s1 + $0x120] sm:$0xf]
    %v97 = vld [vmem:[%s1 + $0x124] sm:$0xf]
    %v98 = vld [vmem:[%s1 + $0x128] sm:$0xf]
    %v99 = vld [vmem:[%s1 + $0x12c] sm:$0xf]
    %v100 = vld [vmem:[%s1 + $0x130] sm:$0xf]
    %v101 = vld [vmem:[%s1 + $0x134] sm:$0xf]
    %v102 = vld [vmem:[%s1 + $0x138] sm:$0xf]
    %v103 = vld [vmem:[%s1 + $0x13c] sm:$0xf]
    %v104 = vld [vmem:[%s1 + $0x140] sm:$0xf]
    %v105 = vld [vmem:[%s1 + $0x144] sm:$0xf]
    %v106 = vld [vmem:[%s1 + $0x148] sm:$0xf]
    %v107 = vld [vmem:[%s1 + $0x14c] sm:$0xf]
    %v108 = vld [vmem:[%s1 + $0x150] sm:$0xf]
    %v109 = vld [vmem:[%s1 + $0x154] sm:$0xf]
    %v110 = vld [vmem:[%s1 + $0x158] sm:$0xf]
    %v111 = vld [vmem:[%s1 + $0x15c] sm:$0xf]
    %v112 = vld [vmem:[%s1 + $0x160] sm:$0xf]
    %v113 = vld [vmem:[%s1 + $0x164] sm:$0xf]
    %v114 = vld [vmem:[%s1 + $0x168] sm:$0xf]
    %v115 = vld [vmem:[%s1 + $0x16c] sm:$0xf]
    %v116 = vld [vmem:[%s1 + $0x170] sm:$0xf]
    %v117 = vld [vmem:[%s1 + $0x174] sm:$0xf]
    %v118 = vld [vmem:[%s1 + $0x178] sm:$0xf]
    %v119 = vld [vmem:[%s1 + $0x17c] sm:$0xf]
    %v120 = vld [vmem:[%s1 + $0x180] sm:$0xf]
    %v121 = vld [vmem:[%s1 + $0x184] sm:$0xf]
    %v122 = vld [vmem:[%s1 + $0x188] sm:$0xf]
    %v123 = vld [vmem:[%s1 + $0x18c] sm:$0xf]
    %v124 = vld [vmem:[%s1 + $0x190] sm:$0xf]
    %v125 = vld [vmem:[%s1 + $0x194] sm:$0xf]
    %v126 = vld [vmem:[%s1 + $0x198] sm:$0xf]
    %v127 = vld [vmem:[%s1 + $0x19c] sm:$0xf]
    %v128 = vld [vmem:[%s1 + $0x1a0] sm:$0xf]
    %v129 = vld [vmem:[%s1 + $0x1a4] sm:$0xf]
    %v130 = vld [vmem:[%s1 + $0x1a8] sm:$0xf]
    %v131 = vld [vmem:[%s1 + $0x1ac] sm:$0xf]
    %v132 = vld [vmem:[%s1 + $0x1b0] sm:$0xf]
    %v133 = vld [vmem:[%s1 + $0x1b4] sm:$0xf]
    %v134 = vld [vmem:[%s1 + $0x1b8] sm:$0xf]
    %v135 = vld [vmem:[%s1 + $0x1bc] sm:$0xf]
    %v136 = vld [vmem:[%s1 + $0x1c0] sm:$0xf]
    %v137 = vld [vmem:[%s1 + $0x1c4] sm:$0xf]
    %v138 = vld [vmem:[%s1 + $0x1c8] sm:$0xf]
    %v139 = vld [vmem:[%s1 + $0x1cc] sm:$0xf]
    %v140 = vld [vmem:[%s1 + $0x1d0] sm:$0xf]
    %v141 = vld [vmem:[%s1 + $0x1d4] sm:$0xf]
    %v142 = vld [vmem:[%s1 + $0x1d8] sm:$0xf]
    %v143 = vld [vmem:[%s1 + $0x1dc] sm:$0xf]
    %v144 = vld [vmem:[%s1 + $0x1e0] sm:$0xf]
    %v145 = vld [vmem:[%s1 + $0x1e4] sm:$0xf]
    %v146 = vld [vmem:[%s1 + $0x1e8] sm:$0xf]
    %v147 = vld [vmem:[%s1 + $0x1ec] sm:$0xf]
    %v148 = vld [vmem:[%s1 + $0x1f0] sm:$0xf]
    %v149 = vld [vmem:[%s1 + $0x1f4] sm:$0xf]
    %v150 = vld [vmem:[%s1 + $0x1f8] sm:$0xf]
    %v151 = vld [vmem:[%s1 + $0x1fc] sm:$0xf]
    %v152 = vld [vmem:[%s1 + $0x200] sm:$0xf]
    %v153 = vld [vmem:[%s1 + $0x204] sm:$0xf]
    %v154 = vld [vmem:[%s1 + $0x208] sm:$0xf]
    %v155 = vld [vmem:[%s1 + $0x20c] sm:$0xf]
    %v156 = vld [vmem:[%s1 + $0x210] sm:$0xf]
    %v157 = vld [vmem:[%s1 + $0x214] sm:$0xf]
    %v158 = vld [vmem:[%s1 + $0x218] sm:$0xf]
    %v159 = vld [vmem:[%s1 + $0x21c] sm:$0xf]
    %v160 = vld [vmem:[%s1 + $0x220] sm:$0xf]
    %v161 = vld [vmem:[%s1 + $0x224] sm:$0xf]
    %v162 = vld [vmem:[%s1 + $0x228] sm:$0xf]
    %v163 = vld [vmem:[%s1 + $0x22c] sm:$0xf]
    %v164 = vld [vmem:[%s1 + $0x230] sm:$0xf]
    %v165 = vld [vmem:[%s1 + $0x234] sm:$0xf]
    %v166 = vld [vmem:[%s1 + $0x238] sm:$0xf]
    %v167 = vld [vmem:[%s1 + $0x23c] sm:$0xf]
    %v168 = vld [vmem:[%s1 + $0x240] sm:$0xf]
    %v169 = vld [vmem:[%s1 + $0x244] sm:$0xf]
    %v170 = vld [vmem:[%s1 + $0x248] sm:$0xf]
    %v171 = vld [vmem:[%s1 + $0x24c] sm:$0xf]
    %v172 = vld [vmem:[%s1 + $0x250] sm:$0xf]
    %v173 = vld [vmem:[%s1 + $0x254] sm:$0xf]
    %v174 = vld [vmem:[%s1 + $0x258] sm:$0xf]
    %v175 = vld [vmem:[%s1 + $0x25c] sm:$0xf]
    %v176 = vld [vmem:[%s1 + $0x260] sm:$0xf]
    %v177 = vld [vmem:[%s1 + $0x264] sm:$0xf]
    %v178 = vld [vmem:[%s1 + $0x268] sm:$0xf]
    %v179 = vld [vmem:[%s1 + $0x26c] sm:$0xf]
    %v180 = vld [vmem:[%s1 + $0x270] sm:$0xf]
    %v181 = vld [vmem:[%s1 + $0x274] sm:$0xf]
    %v182 = vld [vmem:[%s1 + $0x278] sm:$0xf]
    %v183 = vld [vmem:[%s1 + $0x27c] sm:$0xf]
    %v184 = vld [vmem:[%s1 + $0x280] sm:$0xf]
    %v185 = vld [vmem:[%s1 + $0x284] sm:$0xf]
    %v186 = vld [vmem:[%s1 + $0x288] sm:$0xf]
    %v187 = vld [vmem:[%s1 + $0x28c] sm:$0xf]
    %v188 = vld [vmem:[%s1 + $0x290] sm:$0xf]
    %v189 = vld [vmem:[%s1 + $0x294] sm:$0xf]
    %v190 = vld [vmem:[%s1 + $0x298] sm:$0xf]
    %v191 = vld [vmem:[%s1 + $0x29c] sm:$0xf]
    %v192 = vld [vmem:[%s1 + $0x2a0] sm:$0xf]
    %v193 = vld [vmem:[%s1 + $0x2a4] sm:$0xf]
    %v194 = vld [vmem:[%s1 + $0x2a8] sm:$0xf]
    %v195 = vld [vmem:[%s1 + $0x2ac] sm:$0xf]
    %v196 = vld [vmem:[%s1 + $0x2b0] sm:$0xf]
    %v197 = vld [vmem:[%s1 + $0x2b4] sm:$0xf]
    %v198 = vld [vmem:[%s1 + $0x2b8] sm:$0xf]
    %v199 = vld [vmem:[%s1 + $0x2bc] sm:$0xf]
    %v200 = vld [vmem:[%s1 + $0x2c0] sm:$0xf]
    %v201 = vld [vmem:[%s1 + $0x2c4] sm:$0xf]
    %v202 = vld [vmem:[%s1 + $0x2c8] sm:$0xf]
    %v203 = vld [vmem:[%s1 + $0x2cc] sm:$0xf]
    %v204 = vld [vmem:[%s1 + $0x2d0] sm:$0xf]
    %v205 = vld [vmem:[%s1 + $0x2d4] sm:$0xf]
    %v206 = vld [vmem:[%s1 + $0x2d8] sm:$0xf]
    %v207 = vld [vmem:[%s1 + $0x2dc] sm:$0xf]
    %v208 = vld [vmem:[%s1 + $0x2e0] sm:$0xf]
    %v209 = vld [vmem:[%s1 + $0x2e4] sm:$0xf]
    %v210 = vld [vmem:[%s1 + $0x2e8] sm:$0xf]
    %v211 = vld [vmem:[%s1 + $0x2ec] sm:$0xf]
    %v212 = vld [vmem:[%s1 + $0x2f0] sm:$0xf]
    %v213 = vld [vmem:[%s1 + $0x2f4] sm:$0xf]
    %v214 = vld [vmem:[%s1 + $0x2f8] sm:$0xf]
    %v215 = vld [vmem:[%s1 + $0x2fc] sm:$0xf]
    %v216 = vld [vmem:[%s2] sm:$0x1]
    %v218 = vlaneseq
    %v219 = vshrl.u32 %v218, 7
    %v220 = vsub.s32 0, %v219
    %v221 = vrot.slane %v216, %v220
    %v225 = vcombine.high %v22, %v22
    %v227 = vunpack.c.l.s4 1966171168
    %v228 = vunpack.c.0.s8 %v227
    %v229 = vlaneseq
    %v230 = vshrl.u32 %v229, 7
    %v231 = vsub.s32 %v228, %v230
    %v232 = vrot.slane %v22, %v231
    %v234 = vunpack.c.l.s4 1966171168
    %v235 = vunpack.c.0.s8 %v234
    %v236 = vlaneseq
    %v237 = vshrl.u32 %v236, 7
    %v238 = vsub.s32 %v235, %v237
    %v239 = vrot.slane %v225, %v238
    %v240 = vcombine.high %v232, %v232
    %v241 = vcombine.high %v239, %v239
    %v243 = vunpack.c.l.s4 1966171168
    %v244 = vunpack.c.0.s8 %v243
    %v245 = vlaneseq
    %v246 = vshrl.u32 %v245, 7
    %v247 = vsub.s32 %v244, %v246
    %v248 = vrot.slane %v232, %v247
    %v250 = vunpack.c.l.s4 1966171168
    %v251 = vunpack.c.0.s8 %v250
    %v252 = vlaneseq
    %v253 = vshrl.u32 %v252, 7
    %v254 = vsub.s32 %v251, %v253
    %v255 = vrot.slane %v239, %v254
    %v257 = vunpack.c.l.s4 1966171168
    %v258 = vunpack.c.0.s8 %v257
    %v259 = vlaneseq
    %v260 = vshrl.u32 %v259, 7
    %v261 = vsub.s32 %v258, %v260
    %v262 = vrot.slane %v240, %v261
    %v264 = vunpack.c.l.s4 1966171168
    %v265 = vunpack.c.0.s8 %v264
    %v266 = vlaneseq
    %v267 = vshrl.u32 %v266, 7
    %v268 = vsub.s32 %v265, %v267
    %v269 = vrot.slane %v241, %v268
    %v270 = vcombine.high %v248, %v248
    %v271 = vcombine.high %v255, %v255
    %v272 = vcombine.high %v262, %v262
    %v273 = vcombine.high %v269, %v269
    %v275 = vunpack.c.l.s4 1966171168
    %v276 = vunpack.c.0.s8 %v275
    %v277 = vlaneseq
    %v278 = vshrl.u32 %v277, 7
    %v279 = vsub.s32 %v276, %v278
    %v280 = vrot.slane %v23, %v279
    %v281 = vcombine.high %v280, %v280
    %v283 = vunpack.c.l.s4 1966171168
    %v284 = vunpack.c.0.s8 %v283
    %v285 = vlaneseq
    %v286 = vshrl.u32 %v285, 7
    %v287 = vsub.s32 %v284, %v286
    %v288 = vrot.slane %v280, %v287
    %v290 = vunpack.c.l.s4 1966171168
    %v291 = vunpack.c.0.s8 %v290
    %v292 = vlaneseq
    %v293 = vshrl.u32 %v292, 7
    %v294 = vsub.s32 %v291, %v293
    %v295 = vrot.slane %v281, %v294
    %v296 = vcombine.high %v288, %v288
    %v297 = vcombine.high %v295, %v295
    %v502 = vunpack.c.l.b16 %v24
    %v503 = vunpack.c.l.b16 %v25
    %v504 = vunpack.c.l.b16 %v26
    %v505 = vunpack.c.l.b16 %v27
    %v506 = vunpack.c.l.b16 %v28
    %v507 = vunpack.c.l.b16 %v29
    %v508 = vunpack.c.l.b16 %v30
    %v509 = vunpack.c.l.b16 %v31
    %v510 = vunpack.c.l.b16 %v32
    %v511 = vunpack.c.l.b16 %v33
    %v512 = vunpack.c.l.b16 %v34
    %v513 = vunpack.c.l.b16 %v35
    %v514 = vunpack.c.l.b16 %v36
    %v515 = vunpack.c.l.b16 %v37
    %v516 = vunpack.c.l.b16 %v38
    %v517 = vunpack.c.l.b16 %v39
    %v518 = vunpack.c.l.b16 %v40
    %v519 = vunpack.c.l.b16 %v41
    %v520 = vunpack.c.l.b16 %v42
    %v521 = vunpack.c.l.b16 %v43
    %v522 = vunpack.c.l.b16 %v44
    %v523 = vunpack.c.l.b16 %v45
    %v524 = vunpack.c.l.b16 %v46
    %v525 = vunpack.c.l.b16 %v47
    %v526 = vunpack.c.l.b16 %v48
    %v527 = vunpack.c.l.b16 %v49
    %v528 = vunpack.c.l.b16 %v50
    %v529 = vunpack.c.l.b16 %v51
    %v530 = vunpack.c.l.b16 %v52
    %v531 = vunpack.c.l.b16 %v53
    %v532 = vunpack.c.l.b16 %v54
    %v533 = vunpack.c.l.b16 %v55
    %v534 = vunpack.c.l.b16 %v56
    %v535 = vunpack.c.l.b16 %v57
    %v536 = vunpack.c.l.b16 %v58
    %v537 = vunpack.c.l.b16 %v59
    %v538 = vunpack.c.l.b16 %v60
    %v539 = vunpack.c.l.b16 %v61
    %v540 = vunpack.c.l.b16 %v62
    %v541 = vunpack.c.l.b16 %v63
    %v542 = vunpack.c.l.b16 %v64
    %v543 = vunpack.c.l.b16 %v65
    %v544 = vunpack.c.l.b16 %v66
    %v545 = vunpack.c.l.b16 %v67
    %v546 = vunpack.c.l.b16 %v68
    %v547 = vunpack.c.l.b16 %v69
    %v548 = vunpack.c.l.b16 %v70
    %v549 = vunpack.c.l.b16 %v71
    %v550 = vunpack.c.l.b16 %v72
    %v551 = vunpack.c.l.b16 %v73
    %v552 = vunpack.c.l.b16 %v74
    %v553 = vunpack.c.l.b16 %v75
    %v554 = vunpack.c.l.b16 %v76
    %v555 = vunpack.c.l.b16 %v77
    %v556 = vunpack.c.l.b16 %v78
    %v557 = vunpack.c.l.b16 %v79
    %v558 = vunpack.c.l.b16 %v80
    %v559 = vunpack.c.l.b16 %v81
    %v560 = vunpack.c.l.b16 %v82
    %v561 = vunpack.c.l.b16 %v83
    %v562 = vunpack.c.l.b16 %v84
    %v563 = vunpack.c.l.b16 %v85
    %v564 = vunpack.c.l.b16 %v86
    %v565 = vunpack.c.l.b16 %v87
    %v566 = vunpack.c.l.b16 %v88
    %v567 = vunpack.c.l.b16 %v89
    %v568 = vunpack.c.l.b16 %v90
    %v569 = vunpack.c.l.b16 %v91
    %v570 = vunpack.c.l.b16 %v92
    %v571 = vunpack.c.l.b16 %v93
    %v572 = vunpack.c.l.b16 %v94
    %v573 = vunpack.c.l.b16 %v95
    %v574 = vunpack.c.l.b16 %v96
    %v575 = vunpack.c.l.b16 %v97
    %v576 = vunpack.c.l.b16 %v98
    %v577 = vunpack.c.l.b16 %v99
    %v578 = vunpack.c.l.b16 %v100
    %v579 = vunpack.c.l.b16 %v101
    %v580 = vunpack.c.l.b16 %v102
    %v581 = vunpack.c.l.b16 %v103
    %v582 = vunpack.c.l.b16 %v104
    %v583 = vunpack.c.l.b16 %v105
    %v584 = vunpack.c.l.b16 %v106
    %v585 = vunpack.c.l.b16 %v107
    %v586 = vunpack.c.l.b16 %v108
    %v587 = vunpack.c.l.b16 %v109
    %v588 = vunpack.c.l.b16 %v110
    %v589 = vunpack.c.l.b16 %v111
    %v590 = vunpack.c.l.b16 %v112
    %v591 = vunpack.c.l.b16 %v113
    %v592 = vunpack.c.l.b16 %v114
    %v593 = vunpack.c.l.b16 %v115
    %v594 = vunpack.c.l.b16 %v116
    %v595 = vunpack.c.l.b16 %v117
    %v596 = vunpack.c.l.b16 %v118
    %v597 = vunpack.c.l.b16 %v119
    %v598 = vunpack.c.l.b16 %v120
    %v599 = vunpack.c.l.b16 %v121
    %v600 = vunpack.c.l.b16 %v122
    %v601 = vunpack.c.l.b16 %v123
    %v602 = vunpack.c.l.b16 %v124
    %v603 = vunpack.c.l.b16 %v125
    %v604 = vunpack.c.l.b16 %v126
    %v605 = vunpack.c.l.b16 %v127
    %v606 = vunpack.c.l.b16 %v128
    %v607 = vunpack.c.l.b16 %v129
    %v608 = vunpack.c.l.b16 %v130
    %v609 = vunpack.c.l.b16 %v131
    %v610 = vunpack.c.l.b16 %v132
    %v611 = vunpack.c.l.b16 %v133
    %v612 = vunpack.c.l.b16 %v134
    %v613 = vunpack.c.l.b16 %v135
    %v614 = vunpack.c.l.b16 %v136
    %v615 = vunpack.c.l.b16 %v137
    %v616 = vunpack.c.l.b16 %v138
    %v617 = vunpack.c.l.b16 %v139
    %v618 = vunpack.c.l.b16 %v140
    %v619 = vunpack.c.l.b16 %v141
    %v620 = vunpack.c.l.b16 %v142
    %v621 = vunpack.c.l.b16 %v143
    %v622 = vunpack.c.l.b16 %v144
    %v623 = vunpack.c.l.b16 %v145
    %v624 = vunpack.c.l.b16 %v146
    %v625 = vunpack.c.l.b16 %v147
    %v626 = vunpack.c.l.b16 %v148
    %v627 = vunpack.c.l.b16 %v149
    %v628 = vunpack.c.l.b16 %v150
    %v629 = vunpack.c.l.b16 %v151
    %v630 = vunpack.c.l.b16 %v152
    %v631 = vunpack.c.l.b16 %v153
    %v632 = vunpack.c.l.b16 %v154
    %v633 = vunpack.c.l.b16 %v155
    %v634 = vunpack.c.l.b16 %v156
    %v635 = vunpack.c.l.b16 %v157
    %v636 = vunpack.c.l.b16 %v158
    %v637 = vunpack.c.l.b16 %v159
    %v638 = vunpack.c.l.b16 %v160
    %v639 = vunpack.c.l.b16 %v161
    %v640 = vunpack.c.l.b16 %v162
    %v641 = vunpack.c.l.b16 %v163
    %v642 = vunpack.c.l.b16 %v164
    %v643 = vunpack.c.l.b16 %v165
    %v644 = vunpack.c.l.b16 %v166
    %v645 = vunpack.c.l.b16 %v167
    %v646 = vunpack.c.l.b16 %v168
    %v647 = vunpack.c.l.b16 %v169
    %v648 = vunpack.c.l.b16 %v170
    %v649 = vunpack.c.l.b16 %v171
    %v650 = vunpack.c.l.b16 %v172
    %v651 = vunpack.c.l.b16 %v173
    %v652 = vunpack.c.l.b16 %v174
    %v653 = vunpack.c.l.b16 %v175
    %v654 = vunpack.c.l.b16 %v176
    %v655 = vunpack.c.l.b16 %v177
    %v656 = vunpack.c.l.b16 %v178
    %v657 = vunpack.c.l.b16 %v179
    %v658 = vunpack.c.l.b16 %v180
    %v659 = vunpack.c.l.b16 %v181
    %v660 = vunpack.c.l.b16 %v182
    %v661 = vunpack.c.l.b16 %v183
    %v662 = vunpack.c.l.b16 %v184
    %v663 = vunpack.c.l.b16 %v185
    %v664 = vunpack.c.l.b16 %v186
    %v665 = vunpack.c.l.b16 %v187
    %v666 = vunpack.c.l.b16 %v188
    %v667 = vunpack.c.l.b16 %v189
    %v668 = vunpack.c.l.b16 %v190
    %v669 = vunpack.c.l.b16 %v191
    %v670 = vunpack.c.l.b16 %v192
    %v671 = vunpack.c.l.b16 %v193
    %v672 = vunpack.c.l.b16 %v194
    %v673 = vunpack.c.l.b16 %v195
    %v674 = vunpack.c.l.b16 %v196
    %v675 = vunpack.c.l.b16 %v197
    %v676 = vunpack.c.l.b16 %v198
    %v677 = vunpack.c.l.b16 %v199
    %v678 = vunpack.c.l.b16 %v200
    %v679 = vunpack.c.l.b16 %v201
    %v680 = vunpack.c.l.b16 %v202
    %v681 = vunpack.c.l.b16 %v203
    %v682 = vunpack.c.l.b16 %v204
    %v683 = vunpack.c.l.b16 %v205
    %v684 = vunpack.c.l.b16 %v206
    %v685 = vunpack.c.l.b16 %v207
    %v686 = vunpack.c.l.b16 %v208
    %v687 = vunpack.c.l.b16 %v209
    %v688 = vunpack.c.l.b16 %v210
    %v689 = vunpack.c.l.b16 %v211
    %v690 = vunpack.c.l.b16 %v212
    %v691 = vunpack.c.l.b16 %v213
    %v692 = vunpack.c.l.b16 %v214
    %v693 = vunpack.c.l.b16 %v215
    %v694 = vpack.c.b16 %v503, %v502
    %v695 = vpack.c.b16 %v505, %v504
    %v696 = vpack.c.b16 %v507, %v506
    %v697 = vpack.c.b16 %v509, %v508
    %v698 = vpack.c.b16 %v511, %v510
    %v699 = vpack.c.b16 %v513, %v512
    %v700 = vpack.c.b16 %v515, %v514
    %v701 = vpack.c.b16 %v517, %v516
    %v702 = vpack.c.b16 %v519, %v518
    %v703 = vpack.c.b16 %v521, %v520
    %v704 = vpack.c.b16 %v523, %v522
    %v705 = vpack.c.b16 %v525, %v524
    %v706 = vpack.c.b16 %v527, %v526
    %v707 = vpack.c.b16 %v529, %v528
    %v708 = vpack.c.b16 %v531, %v530
    %v709 = vpack.c.b16 %v533, %v532
    %v710 = vpack.c.b16 %v535, %v534
    %v711 = vpack.c.b16 %v537, %v536
    %v712 = vpack.c.b16 %v539, %v538
    %v713 = vpack.c.b16 %v541, %v540
    %v714 = vpack.c.b16 %v543, %v542
    %v715 = vpack.c.b16 %v545, %v544
    %v716 = vpack.c.b16 %v547, %v546
    %v717 = vpack.c.b16 %v549, %v548
    %v718 = vpack.c.b16 %v551, %v550
    %v719 = vpack.c.b16 %v553, %v552
    %v720 = vpack.c.b16 %v555, %v554
    %v721 = vpack.c.b16 %v557, %v556
    %v722 = vpack.c.b16 %v559, %v558
    %v723 = vpack.c.b16 %v561, %v560
    %v724 = vpack.c.b16 %v563, %v562
    %v725 = vpack.c.b16 %v565, %v564
    %v726 = vpack.c.b16 %v567, %v566
    %v727 = vpack.c.b16 %v569, %v568
    %v728 = vpack.c.b16 %v571, %v570
    %v729 = vpack.c.b16 %v573, %v572
    %v730 = vpack.c.b16 %v575, %v574
    %v731 = vpack.c.b16 %v577, %v576
    %v732 = vpack.c.b16 %v579, %v578
    %v733 = vpack.c.b16 %v581, %v580
    %v734 = vpack.c.b16 %v583, %v582
    %v735 = vpack.c.b16 %v585, %v584
    %v736 = vpack.c.b16 %v587, %v586
    %v737 = vpack.c.b16 %v589, %v588
    %v738 = vpack.c.b16 %v591, %v590
    %v739 = vpack.c.b16 %v593, %v592
    %v740 = vpack.c.b16 %v595, %v594
    %v741 = vpack.c.b16 %v597, %v596
    %v742 = vpack.c.b16 %v599, %v598
    %v743 = vpack.c.b16 %v601, %v600
    %v744 = vpack.c.b16 %v603, %v602
    %v745 = vpack.c.b16 %v605, %v604
    %v746 = vpack.c.b16 %v607, %v606
    %v747 = vpack.c.b16 %v609, %v608
    %v748 = vpack.c.b16 %v611, %v610
    %v749 = vpack.c.b16 %v613, %v612
    %v750 = vpack.c.b16 %v615, %v614
    %v751 = vpack.c.b16 %v617, %v616
    %v752 = vpack.c.b16 %v619, %v618
    %v753 = vpack.c.b16 %v621, %v620
    %v754 = vpack.c.b16 %v623, %v622
    %v755 = vpack.c.b16 %v625, %v624
    %v756 = vpack.c.b16 %v627, %v626
    %v757 = vpack.c.b16 %v629, %v628
    %v758 = vpack.c.b16 %v631, %v630
    %v759 = vpack.c.b16 %v633, %v632
    %v760 = vpack.c.b16 %v635, %v634
    %v761 = vpack.c.b16 %v637, %v636
    %v762 = vpack.c.b16 %v639, %v638
    %v763 = vpack.c.b16 %v641, %v640
    %v764 = vpack.c.b16 %v643, %v642
    %v765 = vpack.c.b16 %v645, %v644
    %v766 = vpack.c.b16 %v647, %v646
    %v767 = vpack.c.b16 %v649, %v648
    %v768 = vpack.c.b16 %v651, %v650
    %v769 = vpack.c.b16 %v653, %v652
    %v770 = vpack.c.b16 %v655, %v654
    %v771 = vpack.c.b16 %v657, %v656
    %v772 = vpack.c.b16 %v659, %v658
    %v773 = vpack.c.b16 %v661, %v660
    %v774 = vpack.c.b16 %v663, %v662
    %v775 = vpack.c.b16 %v665, %v664
    %v776 = vpack.c.b16 %v667, %v666
    %v777 = vpack.c.b16 %v669, %v668
    %v778 = vpack.c.b16 %v671, %v670
    %v779 = vpack.c.b16 %v673, %v672
    %v780 = vpack.c.b16 %v675, %v674
    %v781 = vpack.c.b16 %v677, %v676
    %v782 = vpack.c.b16 %v679, %v678
    %v783 = vpack.c.b16 %v681, %v680
    %v784 = vpack.c.b16 %v683, %v682
    %v785 = vpack.c.b16 %v685, %v684
    %v786 = vpack.c.b16 %v687, %v686
    %v787 = vpack.c.b16 %v689, %v688
    %v788 = vpack.c.b16 %v691, %v690
    %v789 = vpack.c.b16 %v693, %v692
    %886 = vmatprep.subr.bf16.mxu0 0
    %887 = vmatpush1.bf16.msra.mxu0 %v701
    %888 = vmatprep.subr.bf16.mxu0 0
    %889 = vmatpush1.bf16.msra.mxu0 %v700
    %890 = vmatprep.subr.bf16.mxu0 0
    %891 = vmatpush1.bf16.msra.mxu0 %v699
    %892 = vmatprep.subr.bf16.mxu0 0
    %893 = vmatpush1.bf16.msra.mxu0 %v698
    %894 = vmatprep.subr.bf16.mxu0 0
    %895 = vmatpush1.bf16.msra.mxu0 %v697
    %896 = vmatprep.subr.bf16.mxu0 0
    %897 = vmatpush1.bf16.msra.mxu0 %v696
    %898 = vmatprep.subr.bf16.mxu0 0
    %899 = vmatpush1.bf16.msra.mxu0 %v695
    %900 = vmatprep.subr.bf16.mxu0 0
    %901 = vmatpush1.bf16.msra.mxu0 %v694
    %902 = vmatprep.subr.bf16.mxu0 0
    %903 = vmatpush2.bf16.msra.mxu0 %v709
    %904 = vmatprep.subr.bf16.mxu0 0
    %905 = vmatpush2.bf16.msra.mxu0 %v708
    %906 = vmatprep.subr.bf16.mxu0 0
    %907 = vmatpush2.bf16.msra.mxu0 %v707
    %908 = vmatprep.subr.bf16.mxu0 0
    %909 = vmatpush2.bf16.msra.mxu0 %v706
    %910 = vmatprep.subr.bf16.mxu0 0
    %911 = vmatpush2.bf16.msra.mxu0 %v705
    %912 = vmatprep.subr.bf16.mxu0 0
    %913 = vmatpush2.bf16.msra.mxu0 %v704
    %914 = vmatprep.subr.bf16.mxu0 0
    %915 = vmatpush2.bf16.msra.mxu0 %v703
    %916 = vmatprep.subr.bf16.mxu0 0
    %917 = vmatpush2.bf16.msra.mxu0 %v702
    %918 = vmatprep.mubr.bf16.mxu0 %v262
    %919 = vmatmul.mubr.bf16.gmra.mxu0 %v248
    %v920 = vpop.f32.mrf.mxu0
    %v921 = vadd.f32 %v221, %v920
    %v922 = vpop.f32.mrf.mxu0
    %v923 = vpop.f32.mrf.mxu0
    %v924 = vpop.f32.mrf.mxu0
    %925 = vdwg.mxu0
    %926 = vmatprep.subr.bf16.mxu0 0
    %927 = vmatpush1.bf16.msra.mxu0 %v717
    %928 = vmatprep.subr.bf16.mxu0 0
    %929 = vmatpush1.bf16.msra.mxu0 %v716
    %930 = vmatprep.subr.bf16.mxu0 0
    %931 = vmatpush1.bf16.msra.mxu0 %v715
    %932 = vmatprep.subr.bf16.mxu0 0
    %933 = vmatpush1.bf16.msra.mxu0 %v714
    %934 = vmatprep.subr.bf16.mxu0 0
    %935 = vmatpush1.bf16.msra.mxu0 %v713
    %936 = vmatprep.subr.bf16.mxu0 0
    %937 = vmatpush1.bf16.msra.mxu0 %v712
    %938 = vmatprep.subr.bf16.mxu0 0
    %939 = vmatpush1.bf16.msra.mxu0 %v711
    %940 = vmatprep.subr.bf16.mxu0 0
    %941 = vmatpush1.bf16.msra.mxu0 %v710
    %942 = vmatprep.subr.bf16.mxu0 0
    %943 = vmatpush2.bf16.msra.mxu0 %v725
    %944 = vmatprep.subr.bf16.mxu0 0
    %945 = vmatpush2.bf16.msra.mxu0 %v724
    %946 = vmatprep.subr.bf16.mxu0 0
    %947 = vmatpush2.bf16.msra.mxu0 %v723
    %948 = vmatprep.subr.bf16.mxu0 0
    %949 = vmatpush2.bf16.msra.mxu0 %v722
    %950 = vmatprep.subr.bf16.mxu0 0
    %951 = vmatpush2.bf16.msra.mxu0 %v721
    %952 = vmatprep.subr.bf16.mxu0 0
    %953 = vmatpush2.bf16.msra.mxu0 %v720
    %954 = vmatprep.subr.bf16.mxu0 0
    %955 = vmatpush2.bf16.msra.mxu0 %v719
    %956 = vmatprep.subr.bf16.mxu0 0
    %957 = vmatpush2.bf16.msra.mxu0 %v718
    %958 = vmatprep.mubr.bf16.mxu0 %v272
    %959 = vmatmul.mubr.bf16.gmra.mxu0 %v270
    %v960 = vpop.f32.mrf.mxu0
    %v961 = vadd.f32 %v921, %v960
    %v962 = vpop.f32.mrf.mxu0
    %v963 = vpop.f32.mrf.mxu0
    %v964 = vpop.f32.mrf.mxu0
    %965 = vdwg.mxu0
    %966 = vmatprep.subr.bf16.mxu0 0
    %967 = vmatpush1.bf16.msra.mxu0 %v733
    %968 = vmatprep.subr.bf16.mxu0 0
    %969 = vmatpush1.bf16.msra.mxu0 %v732
    %970 = vmatprep.subr.bf16.mxu0 0
    %971 = vmatpush1.bf16.msra.mxu0 %v731
    %972 = vmatprep.subr.bf16.mxu0 0
    %973 = vmatpush1.bf16.msra.mxu0 %v730
    %974 = vmatprep.subr.bf16.mxu0 0
    %975 = vmatpush1.bf16.msra.mxu0 %v729
    %976 = vmatprep.subr.bf16.mxu0 0
    %977 = vmatpush1.bf16.msra.mxu0 %v728
    %978 = vmatprep.subr.bf16.mxu0 0
    %979 = vmatpush1.bf16.msra.mxu0 %v727
    %980 = vmatprep.subr.bf16.mxu0 0
    %981 = vmatpush1.bf16.msra.mxu0 %v726
    %982 = vmatprep.subr.bf16.mxu0 0
    %983 = vmatpush2.bf16.msra.mxu0 %v741
    %984 = vmatprep.subr.bf16.mxu0 0
    %985 = vmatpush2.bf16.msra.mxu0 %v740
    %986 = vmatprep.subr.bf16.mxu0 0
    %987 = vmatpush2.bf16.msra.mxu0 %v739
    %988 = vmatprep.subr.bf16.mxu0 0
    %989 = vmatpush2.bf16.msra.mxu0 %v738
    %990 = vmatprep.subr.bf16.mxu0 0
    %991 = vmatpush2.bf16.msra.mxu0 %v737
    %992 = vmatprep.subr.bf16.mxu0 0
    %993 = vmatpush2.bf16.msra.mxu0 %v736
    %994 = vmatprep.subr.bf16.mxu0 0
    %995 = vmatpush2.bf16.msra.mxu0 %v735
    %996 = vmatprep.subr.bf16.mxu0 0
    %997 = vmatpush2.bf16.msra.mxu0 %v734
    %998 = vmatprep.mubr.bf16.mxu0 %v269
    %999 = vmatmul.mubr.bf16.gmra.mxu0 %v255
    %v1000 = vpop.f32.mrf.mxu0
    %v1001 = vadd.f32 %v961, %v1000
    %v1002 = vpop.f32.mrf.mxu0
    %v1003 = vpop.f32.mrf.mxu0
    %v1004 = vpop.f32.mrf.mxu0
    %1005 = vdwg.mxu0
    %1006 = vmatprep.subr.bf16.mxu0 0
    %1007 = vmatpush1.bf16.msra.mxu0 %v749
    %1008 = vmatprep.subr.bf16.mxu0 0
    %1009 = vmatpush1.bf16.msra.mxu0 %v748
    %1010 = vmatprep.subr.bf16.mxu0 0
    %1011 = vmatpush1.bf16.msra.mxu0 %v747
    %1012 = vmatprep.subr.bf16.mxu0 0
    %1013 = vmatpush1.bf16.msra.mxu0 %v746
    %1014 = vmatprep.subr.bf16.mxu0 0
    %1015 = vmatpush1.bf16.msra.mxu0 %v745
    %1016 = vmatprep.subr.bf16.mxu0 0
    %1017 = vmatpush1.bf16.msra.mxu0 %v744
    %1018 = vmatprep.subr.bf16.mxu0 0
    %1019 = vmatpush1.bf16.msra.mxu0 %v743
    %1020 = vmatprep.subr.bf16.mxu0 0
    %1021 = vmatpush1.bf16.msra.mxu0 %v742
    %1022 = vmatprep.subr.bf16.mxu0 0
    %1023 = vmatpush2.bf16.msra.mxu0 %v757
    %1024 = vmatprep.subr.bf16.mxu0 0
    %1025 = vmatpush2.bf16.msra.mxu0 %v756
    %1026 = vmatprep.subr.bf16.mxu0 0
    %1027 = vmatpush2.bf16.msra.mxu0 %v755
    %1028 = vmatprep.subr.bf16.mxu0 0
    %1029 = vmatpush2.bf16.msra.mxu0 %v754
    %1030 = vmatprep.subr.bf16.mxu0 0
    %1031 = vmatpush2.bf16.msra.mxu0 %v753
    %1032 = vmatprep.subr.bf16.mxu0 0
    %1033 = vmatpush2.bf16.msra.mxu0 %v752
    %1034 = vmatprep.subr.bf16.mxu0 0
    %1035 = vmatpush2.bf16.msra.mxu0 %v751
    %1036 = vmatprep.subr.bf16.mxu0 0
    %1037 = vmatpush2.bf16.msra.mxu0 %v750
    %1038 = vmatprep.mubr.bf16.mxu0 %v273
    %1039 = vmatmul.mubr.bf16.gmra.mxu0 %v271
    %v1040 = vpop.f32.mrf.mxu0
    %v1041 = vadd.f32 %v1001, %v1040
    %v1042 = vpop.f32.mrf.mxu0
    %v1043 = vpop.f32.mrf.mxu0
    %v1044 = vpop.f32.mrf.mxu0
    %1045 = vdwg.mxu0
    %1046 = vmatprep.subr.bf16.mxu0 0
    %1047 = vmatpush1.bf16.msra.mxu0 %v765
    %1048 = vmatprep.subr.bf16.mxu0 0
    %1049 = vmatpush1.bf16.msra.mxu0 %v764
    %1050 = vmatprep.subr.bf16.mxu0 0
    %1051 = vmatpush1.bf16.msra.mxu0 %v763
    %1052 = vmatprep.subr.bf16.mxu0 0
    %1053 = vmatpush1.bf16.msra.mxu0 %v762
    %1054 = vmatprep.subr.bf16.mxu0 0
    %1055 = vmatpush1.bf16.msra.mxu0 %v761
    %1056 = vmatprep.subr.bf16.mxu0 0
    %1057 = vmatpush1.bf16.msra.mxu0 %v760
    %1058 = vmatprep.subr.bf16.mxu0 0
    %1059 = vmatpush1.bf16.msra.mxu0 %v759
    %1060 = vmatprep.subr.bf16.mxu0 0
    %1061 = vmatpush1.bf16.msra.mxu0 %v758
    %1062 = vmatprep.subr.bf16.mxu0 0
    %1063 = vmatpush2.bf16.msra.mxu0 %v773
    %1064 = vmatprep.subr.bf16.mxu0 0
    %1065 = vmatpush2.bf16.msra.mxu0 %v772
    %1066 = vmatprep.subr.bf16.mxu0 0
    %1067 = vmatpush2.bf16.msra.mxu0 %v771
    %1068 = vmatprep.subr.bf16.mxu0 0
    %1069 = vmatpush2.bf16.msra.mxu0 %v770
    %1070 = vmatprep.subr.bf16.mxu0 0
    %1071 = vmatpush2.bf16.msra.mxu0 %v769
    %1072 = vmatprep.subr.bf16.mxu0 0
    %1073 = vmatpush2.bf16.msra.mxu0 %v768
    %1074 = vmatprep.subr.bf16.mxu0 0
    %1075 = vmatpush2.bf16.msra.mxu0 %v767
    %1076 = vmatprep.subr.bf16.mxu0 0
    %1077 = vmatpush2.bf16.msra.mxu0 %v766
    %1078 = vmatprep.mubr.bf16.mxu0 %v295
    %1079 = vmatmul.mubr.bf16.gmra.mxu0 %v288
    %v1080 = vpop.f32.mrf.mxu0
    %v1081 = vadd.f32 %v1041, %v1080
    %v1082 = vpop.f32.mrf.mxu0
    %v1083 = vpop.f32.mrf.mxu0
    %v1084 = vpop.f32.mrf.mxu0
    %1085 = vdwg.mxu0
    %1086 = vmatprep.subr.bf16.mxu0 0
    %1087 = vmatpush1.bf16.msra.mxu0 %v781
    %1088 = vmatprep.subr.bf16.mxu0 0
    %1089 = vmatpush1.bf16.msra.mxu0 %v780
    %1090 = vmatprep.subr.bf16.mxu0 0
    %1091 = vmatpush1.bf16.msra.mxu0 %v779
    %1092 = vmatprep.subr.bf16.mxu0 0
    %1093 = vmatpush1.bf16.msra.mxu0 %v778
    %1094 = vmatprep.subr.bf16.mxu0 0
    %1095 = vmatpush1.bf16.msra.mxu0 %v777
    %1096 = vmatprep.subr.bf16.mxu0 0
    %1097 = vmatpush1.bf16.msra.mxu0 %v776
    %1098 = vmatprep.subr.bf16.mxu0 0
    %1099 = vmatpush1.bf16.msra.mxu0 %v775
    %1100 = vmatprep.subr.bf16.mxu0 0
    %1101 = vmatpush1.bf16.msra.mxu0 %v774
    %1102 = vmatprep.subr.bf16.mxu0 0
    %1103 = vmatpush2.bf16.msra.mxu0 %v789
    %1104 = vmatprep.subr.bf16.mxu0 0
    %1105 = vmatpush2.bf16.msra.mxu0 %v788
    %1106 = vmatprep.subr.bf16.mxu0 0
    %1107 = vmatpush2.bf16.msra.mxu0 %v787
    %1108 = vmatprep.subr.bf16.mxu0 0
    %1109 = vmatpush2.bf16.msra.mxu0 %v786
    %1110 = vmatprep.subr.bf16.mxu0 0
    %1111 = vmatpush2.bf16.msra.mxu0 %v785
    %1112 = vmatprep.subr.bf16.mxu0 0
    %1113 = vmatpush2.bf16.msra.mxu0 %v784
    %1114 = vmatprep.subr.bf16.mxu0 0
    %1115 = vmatpush2.bf16.msra.mxu0 %v783
    %1116 = vmatprep.subr.bf16.mxu0 0
    %1117 = vmatpush2.bf16.msra.mxu0 %v782
    %1118 = vmatprep.mubr.bf16.mxu0 %v297
    %1119 = vmatmul.mubr.bf16.gmra.mxu0 %v296
    %v1120 = vpop.f32.mrf.mxu0
    %v1121 = vadd.f32 %v1081, %v1120
    %v1122 = vpop.f32.mrf.mxu0
    %v1123 = vpop.f32.mrf.mxu0
    %v1124 = vpop.f32.mrf.mxu0
    %1125 = vdwg.mxu0
    %v1126 = vmax.f32 %v1121, 0.0
    %v1127 = vpack.c.bf16 %v1126, %v1126
    %v1128 = vld [vmem:[%s3] sm:$0xf]
    %v1129 = vld [vmem:[%s3 + $0x4] sm:$0xf]
    %v1130 = vld [vmem:[%s3 + $0x8] sm:$0xf]
    %v1131 = vld [vmem:[%s3 + $0xc] sm:$0xf]
    %v1132 = vld [vmem:[%s3 + $0x10] sm:$0xf]
    %v1133 = vld [vmem:[%s3 + $0x14] sm:$0xf]
    %v1134 = vld [vmem:[%s3 + $0x18] sm:$0xf]
    %v1135 = vld [vmem:[%s3 + $0x1c] sm:$0xf]
    %v1136 = vld [vmem:[%s3 + $0x20] sm:$0xf]
    %v1137 = vld [vmem:[%s3 + $0x24] sm:$0xf]
    %v1138 = vld [vmem:[%s3 + $0x28] sm:$0xf]
    %v1139 = vld [vmem:[%s3 + $0x2c] sm:$0xf]
    %v1140 = vld [vmem:[%s3 + $0x30] sm:$0xf]
    %v1141 = vld [vmem:[%s3 + $0x34] sm:$0xf]
    %v1142 = vld [vmem:[%s3 + $0x38] sm:$0xf]
    %v1143 = vld [vmem:[%s3 + $0x3c] sm:$0xf]
    %v1144 = vld [vmem:[%s4] sm:$0x1]
    %v1146 = vlaneseq
    %v1147 = vshrl.u32 %v1146, 7
    %v1148 = vsub.s32 0, %v1147
    %v1149 = vrot.slane %v1144, %v1148
    %v1167 = vunpack.c.l.b16 %v1128
    %v1168 = vunpack.c.l.b16 %v1129
    %v1169 = vunpack.c.l.b16 %v1130
    %v1170 = vunpack.c.l.b16 %v1131
    %v1171 = vunpack.c.l.b16 %v1132
    %v1172 = vunpack.c.l.b16 %v1133
    %v1173 = vunpack.c.l.b16 %v1134
    %v1174 = vunpack.c.l.b16 %v1135
    %v1175 = vunpack.c.l.b16 %v1136
    %v1176 = vunpack.c.l.b16 %v1137
    %v1177 = vunpack.c.l.b16 %v1138
    %v1178 = vunpack.c.l.b16 %v1139
    %v1179 = vunpack.c.l.b16 %v1140
    %v1180 = vunpack.c.l.b16 %v1141
    %v1181 = vunpack.c.l.b16 %v1142
    %v1182 = vunpack.c.l.b16 %v1143
    %v1183 = vpack.c.b16 %v1168, %v1167
    %v1184 = vpack.c.b16 %v1170, %v1169
    %v1185 = vpack.c.b16 %v1172, %v1171
    %v1186 = vpack.c.b16 %v1174, %v1173
    %v1187 = vpack.c.b16 %v1176, %v1175
    %v1188 = vpack.c.b16 %v1178, %v1177
    %v1189 = vpack.c.b16 %v1180, %v1179
    %v1190 = vpack.c.b16 %v1182, %v1181
    %1199 = vmatprep.subr.bf16.mxu0 0
    %1200 = vmatpush1.bf16.msra.mxu0 %v1190
    %1201 = vmatprep.subr.bf16.mxu0 0
    %1202 = vmatpush1.bf16.msra.mxu0 %v1189
    %1203 = vmatprep.subr.bf16.mxu0 0
    %1204 = vmatpush1.bf16.msra.mxu0 %v1188
    %1205 = vmatprep.subr.bf16.mxu0 0
    %1206 = vmatpush1.bf16.msra.mxu0 %v1187
    %1207 = vmatprep.subr.bf16.mxu0 0
    %1208 = vmatpush1.bf16.msra.mxu0 %v1186
    %1209 = vmatprep.subr.bf16.mxu0 0
    %1210 = vmatpush1.bf16.msra.mxu0 %v1185
    %1211 = vmatprep.subr.bf16.mxu0 0
    %1212 = vmatpush1.bf16.msra.mxu0 %v1184
    %1213 = vmatprep.subr.bf16.mxu0 0
    %1214 = vmatpush1.bf16.msra.mxu0 %v1183
    %1215 = vmatprep.subr.bf16.mxu0 0
    %1216 = vmatpush2.bf16.msra.mxu0 0
    %1217 = vmatprep.subr.bf16.mxu0 0
    %1218 = vmatpush2.bf16.msra.mxu0 0
    %1219 = vmatprep.subr.bf16.mxu0 0
    %1220 = vmatpush2.bf16.msra.mxu0 0
    %1221 = vmatprep.subr.bf16.mxu0 0
    %1222 = vmatpush2.bf16.msra.mxu0 0
    %1223 = vmatprep.subr.bf16.mxu0 0
    %1224 = vmatpush2.bf16.msra.mxu0 0
    %1225 = vmatprep.subr.bf16.mxu0 0
    %1226 = vmatpush2.bf16.msra.mxu0 0
    %1227 = vmatprep.subr.bf16.mxu0 0
    %1228 = vmatpush2.bf16.msra.mxu0 0
    %1229 = vmatprep.subr.bf16.mxu0 0
    %1230 = vmatpush2.bf16.msra.mxu0 0
    %1231 = vmatprep.mubr.bf16.mxu0 0
    %1232 = vmatmul.mubr.bf16.gmra.mxu0 %v1127
    %v1233 = vpop.f32.mrf.mxu0
    %v1234 = vadd.f32 %v1149, %v1233
    %v1235 = vpop.f32.mrf.mxu0
    %v1236 = vpop.f32.mrf.mxu0
    %v1237 = vpop.f32.mrf.mxu0
    %1238 = vdwg.mxu0
    %vm1239 = vcmask 123904
    %1240 = vst.msk [vmem:[#allocation2] sm:$0x3] %vm1239, %v1234
    // Predicated region
    $region22: #{animal_baseline_forward.7} parent=1 // pred_check
      _
    $region23: #{animal_baseline_forward.7} parent=1 // pred_check_branch
      %1242 = sbr.rel (0) target = $region25
    $region24: #{animal_baseline_forward.7} parent=1 // pred_region
      %s1244 = ssub.s32 32, 32
      %1245 = vsyncadd [#allocation3], %s1244
      %s1247 = sshll.u32 [#allocation2], 4
      %s1248 = int_to_ptr.vmem [resolvable:$true] %s1247
      %1250 = dma.vmem_to_hbm [thread:$0]  %s1248, 32, %s5, [#allocation3]
    $region25: #{animal_baseline_forward.7} parent=1 // pred_fallthru
      _
    // Predicated region
    $region26: #{animal_baseline_forward.7} parent=1 // pred_check
      _
    $region27: #{animal_baseline_forward.7} parent=1 // pred_check_branch
      %1252 = sbr.rel (0) target = $region29
    $region28: #{animal_baseline_forward.7} parent=1 // pred_region
      %1253 = dma.done [#allocation3], 32
    $region29: #{animal_baseline_forward.7} parent=1 // pred_fallthru
      _
    %1254 = vsyncpa [#allocation3], 1

</llo_original>
